<compile_context>
chip_gen: v7x
topology: tpu7x:2x2x1
jax: 0.10.0
libtpu: 0.0.40
codegen_flags: <defaults>
</compile_context>

<pallas_src>
import math

import jax
import jax.numpy as jnp
from jax.experimental import pallas as pl
from jax.experimental.pallas import tpu as pltpu


# Layer dims of My_Model: 784 -> 256 -> 256 -> 256 -> 256 -> 100
DIMS = [28 * 28, 256, 256, 256, 256, 100]
D_IN_PAD = 896    # 784 padded to 7*128 lanes
D_OUT_PAD = 128   # 100 padded to 128 lanes
B_PAD = 8         # batch padded to the sublane quantum


def fused_nor_kernel(x_ref,
                     m0a, m0b, m1a, m1b, m2a, m2b, m3a, m3b, m4a, m4b,
                     o_ref):
    """Five fused layers of: out = 1 - (a + b - a*b), a/b = x @ one_hot_mask.T."""

    def nor_layer(h, ma_ref, mb_ref):
        a = jnp.dot(h, ma_ref[...], preferred_element_type=jnp.float32)
        b = jnp.dot(h, mb_ref[...], preferred_element_type=jnp.float32)
        # OS_Nor: a + b - a*b ; My_Model loop: 1 - (...)
        return jnp.float32(1.0) - (a + b - a * b)

    h = x_ref[...]                                         # bf16 (B_PAD, 896)
    h = nor_layer(h, m0a, m0b).astype(jnp.bfloat16)        # exact 0/1 -> lossless
    h = nor_layer(h, m1a, m1b).astype(jnp.bfloat16)
    h = nor_layer(h, m2a, m2b).astype(jnp.bfloat16)
    h = nor_layer(h, m3a, m3b).astype(jnp.bfloat16)
    o_ref[...] = nor_layer(h, m4a, m4b)                    # f32 (B_PAD, 128)


def my_model_forward(x, masks):
    """x: (B, 784) float32 binary. masks: list of 5 (mask_a_t, mask_b_t) bf16 pairs."""
    B, d_in = x.shape
    xp = jnp.zeros((B_PAD, D_IN_PAD), jnp.bfloat16)
    xp = xp.at[:B, :d_in].set(x.astype(jnp.bfloat16))

    flat_masks = [m for pair in masks for m in pair]       # 10 arrays
    vmem = pl.BlockSpec(memory_space=pltpu.MemorySpace.VMEM)

    out = pl.pallas_call(
        fused_nor_kernel,
        out_shape=jax.ShapeDtypeStruct((B_PAD, D_OUT_PAD), jnp.float32),
        in_specs=[vmem] * (1 + len(flat_masks)),
        out_specs=vmem,
    )(xp, *flat_masks)

    return out[:B, :DIMS[-1]]


# ---------------- parameter preprocessing (plain JAX, not the hot path) ----


def xavier_uniform(key, out_features, in_features):
    limit = math.sqrt(6.0 / (in_features + out_features))
    return jax.random.uniform(
        key, (out_features, in_features), jnp.float32, -limit, limit
    )


def hard_mask_t_padded(weight, in_pad, out_pad):
    """my_hard_mask(weight) forward value == one_hot(argmax), transposed to
    (in, out), zero-padded to (in_pad, out_pad), cast to bf16 (exact 0/1)."""
    out_f, in_f = weight.shape
    idx = jnp.argmax(weight, axis=1)                                  # (out,)
    mask_t = jax.nn.one_hot(idx, in_f, dtype=jnp.float32).T           # (in, out)
    padded = jnp.zeros((in_pad, out_pad), jnp.float32)
    padded = padded.at[:in_f, :out_f].set(mask_t)
    return padded.astype(jnp.bfloat16)


def build_params(key):
    pads_in = [D_IN_PAD, 256, 256, 256, 256]
    pads_out = [256, 256, 256, 256, D_OUT_PAD]
    masks, weights = [], []
    for i in range(len(DIMS) - 1):
        key, ka, kb = jax.random.split(key, 3)
        wa = xavier_uniform(ka, DIMS[i + 1], DIMS[i])
        wb = xavier_uniform(kb, DIMS[i + 1], DIMS[i])
        weights.append((wa, wb))
        masks.append((hard_mask_t_padded(wa, pads_in[i], pads_out[i]),
                      hard_mask_t_padded(wb, pads_in[i], pads_out[i])))
    return masks, weights


def my_model_reference(x, weights):
    """Pure-JAX f32 reference (independent of the padded bf16 masks)."""
    out = x
    for wa, wb in weights:
        ma = jax.nn.one_hot(jnp.argmax(wa, axis=1), wa.shape[1], dtype=jnp.float32)
        mb = jax.nn.one_hot(jnp.argmax(wb, axis=1), wb.shape[1], dtype=jnp.float32)
        a = out @ ma.T
        b = out @ mb.T
        out = 1.0 - (a + b - a * b)
    return out


if __name__ == "__main__":
    key = jax.random.PRNGKey(0)
    key, kx = jax.random.split(key)

    # Binary input (check_binary_tensor semantics), batch=2, 28*28 features.
    x = (jax.random.uniform(kx, (2, 28 * 28)) > 0.5).astype(jnp.float32)

    masks, weights = build_params(key)

    out = my_model_forward(x, masks)
    out = jax.block_until_ready(out)

    assert out.shape == (2, 100), out.shape
    # check_binary_tensor equivalent on the final output
    assert bool(jnp.all((out == 0.0) | (out == 1.0))), "output not binary"
    ref = my_model_reference(x, weights)
    assert bool(jnp.allclose(out, ref)), "mismatch vs reference"

    print("KERNEL_OK")
</pallas_src>

<mosaic_0001>
module attributes {stable_mosaic.version = 11 : i64} {
  func.func @fused_nor_kernel(%arg0: memref<8x896xbf16, #tpu.memory_space<vmem>>, %arg1: memref<896x256xbf16, #tpu.memory_space<vmem>>, %arg2: memref<896x256xbf16, #tpu.memory_space<vmem>>, %arg3: memref<256x256xbf16, #tpu.memory_space<vmem>>, %arg4: memref<256x256xbf16, #tpu.memory_space<vmem>>, %arg5: memref<256x256xbf16, #tpu.memory_space<vmem>>, %arg6: memref<256x256xbf16, #tpu.memory_space<vmem>>, %arg7: memref<256x256xbf16, #tpu.memory_space<vmem>>, %arg8: memref<256x256xbf16, #tpu.memory_space<vmem>>, %arg9: memref<256x128xbf16, #tpu.memory_space<vmem>>, %arg10: memref<256x128xbf16, #tpu.memory_space<vmem>>, %arg11: memref<8x128xf32, #tpu.memory_space<vmem>>) attributes {dimension_semantics = [], scalar_prefetch = 0 : i64, scratch_operands = 0 : i64, tpu.core_type = #tpu.core_type<tc>} {
    %c0 = arith.constant 0 : index
    %c0_0 = arith.constant 0 : index
    %0 = vector.load %arg0[%c0, %c0_0] : memref<8x896xbf16, #tpu.memory_space<vmem>>, vector<8x896xbf16>
    %c0_1 = arith.constant 0 : index
    %c0_2 = arith.constant 0 : index
    %1 = vector.load %arg1[%c0_1, %c0_2] : memref<896x256xbf16, #tpu.memory_space<vmem>>, vector<896x256xbf16>
    %cst = arith.constant dense<0.000000e+00> : vector<8x256xf32>
    %2 = tpu.matmul %0, %1, %cst {dimension_numbers = #tpu.dot_dimension_numbers<[1], [0], [0], [1], [0, 0, 1, 1], [], []>} : vector<8x896xbf16>, vector<896x256xbf16>, vector<8x256xf32> -> vector<8x256xf32>
    %c0_3 = arith.constant 0 : index
    %c0_4 = arith.constant 0 : index
    %3 = vector.load %arg2[%c0_3, %c0_4] : memref<896x256xbf16, #tpu.memory_space<vmem>>, vector<896x256xbf16>
    %cst_5 = arith.constant dense<0.000000e+00> : vector<8x256xf32>
    %4 = tpu.matmul %0, %3, %cst_5 {dimension_numbers = #tpu.dot_dimension_numbers<[1], [0], [0], [1], [0, 0, 1, 1], [], []>} : vector<8x896xbf16>, vector<896x256xbf16>, vector<8x256xf32> -> vector<8x256xf32>
    %5 = arith.addf %2, %4 : vector<8x256xf32>
    %6 = arith.mulf %2, %4 : vector<8x256xf32>
    %7 = arith.subf %5, %6 : vector<8x256xf32>
    %cst_6 = arith.constant 1.000000e+00 : f32
    %8 = vector.broadcast %cst_6 : f32 to vector<8x256xf32>
    %9 = arith.subf %8, %7 : vector<8x256xf32>
    %10 = arith.truncf %9 : vector<8x256xf32> to vector<8x256xbf16>
    %c0_7 = arith.constant 0 : index
    %c0_8 = arith.constant 0 : index
    %11 = vector.load %arg3[%c0_7, %c0_8] : memref<256x256xbf16, #tpu.memory_space<vmem>>, vector<256x256xbf16>
    %cst_9 = arith.constant dense<0.000000e+00> : vector<8x256xf32>
    %12 = tpu.matmul %10, %11, %cst_9 {dimension_numbers = #tpu.dot_dimension_numbers<[1], [0], [0], [1], [0, 0, 1, 1], [], []>} : vector<8x256xbf16>, vector<256x256xbf16>, vector<8x256xf32> -> vector<8x256xf32>
    %c0_10 = arith.constant 0 : index
    %c0_11 = arith.constant 0 : index
    %13 = vector.load %arg4[%c0_10, %c0_11] : memref<256x256xbf16, #tpu.memory_space<vmem>>, vector<256x256xbf16>
    %cst_12 = arith.constant dense<0.000000e+00> : vector<8x256xf32>
    %14 = tpu.matmul %10, %13, %cst_12 {dimension_numbers = #tpu.dot_dimension_numbers<[1], [0], [0], [1], [0, 0, 1, 1], [], []>} : vector<8x256xbf16>, vector<256x256xbf16>, vector<8x256xf32> -> vector<8x256xf32>
    %15 = arith.addf %12, %14 : vector<8x256xf32>
    %16 = arith.mulf %12, %14 : vector<8x256xf32>
    %17 = arith.subf %15, %16 : vector<8x256xf32>
    %cst_13 = arith.constant 1.000000e+00 : f32
    %18 = vector.broadcast %cst_13 : f32 to vector<8x256xf32>
    %19 = arith.subf %18, %17 : vector<8x256xf32>
    %20 = arith.truncf %19 : vector<8x256xf32> to vector<8x256xbf16>
    %c0_14 = arith.constant 0 : index
    %c0_15 = arith.constant 0 : index
    %21 = vector.load %arg5[%c0_14, %c0_15] : memref<256x256xbf16, #tpu.memory_space<vmem>>, vector<256x256xbf16>
    %cst_16 = arith.constant dense<0.000000e+00> : vector<8x256xf32>
    %22 = tpu.matmul %20, %21, %cst_16 {dimension_numbers = #tpu.dot_dimension_numbers<[1], [0], [0], [1], [0, 0, 1, 1], [], []>} : vector<8x256xbf16>, vector<256x256xbf16>, vector<8x256xf32> -> vector<8x256xf32>
    %c0_17 = arith.constant 0 : index
    %c0_18 = arith.constant 0 : index
    %23 = vector.load %arg6[%c0_17, %c0_18] : memref<256x256xbf16, #tpu.memory_space<vmem>>, vector<256x256xbf16>
    %cst_19 = arith.constant dense<0.000000e+00> : vector<8x256xf32>
    %24 = tpu.matmul %20, %23, %cst_19 {dimension_numbers = #tpu.dot_dimension_numbers<[1], [0], [0], [1], [0, 0, 1, 1], [], []>} : vector<8x256xbf16>, vector<256x256xbf16>, vector<8x256xf32> -> vector<8x256xf32>
    %25 = arith.addf %22, %24 : vector<8x256xf32>
    %26 = arith.mulf %22, %24 : vector<8x256xf32>
    %27 = arith.subf %25, %26 : vector<8x256xf32>
    %cst_20 = arith.constant 1.000000e+00 : f32
    %28 = vector.broadcast %cst_20 : f32 to vector<8x256xf32>
    %29 = arith.subf %28, %27 : vector<8x256xf32>
    %30 = arith.truncf %29 : vector<8x256xf32> to vector<8x256xbf16>
    %c0_21 = arith.constant 0 : index
    %c0_22 = arith.constant 0 : index
    %31 = vector.load %arg7[%c0_21, %c0_22] : memref<256x256xbf16, #tpu.memory_space<vmem>>, vector<256x256xbf16>
    %cst_23 = arith.constant dense<0.000000e+00> : vector<8x256xf32>
    %32 = tpu.matmul %30, %31, %cst_23 {dimension_numbers = #tpu.dot_dimension_numbers<[1], [0], [0], [1], [0, 0, 1, 1], [], []>} : vector<8x256xbf16>, vector<256x256xbf16>, vector<8x256xf32> -> vector<8x256xf32>
    %c0_24 = arith.constant 0 : index
    %c0_25 = arith.constant 0 : index
    %33 = vector.load %arg8[%c0_24, %c0_25] : memref<256x256xbf16, #tpu.memory_space<vmem>>, vector<256x256xbf16>
    %cst_26 = arith.constant dense<0.000000e+00> : vector<8x256xf32>
    %34 = tpu.matmul %30, %33, %cst_26 {dimension_numbers = #tpu.dot_dimension_numbers<[1], [0], [0], [1], [0, 0, 1, 1], [], []>} : vector<8x256xbf16>, vector<256x256xbf16>, vector<8x256xf32> -> vector<8x256xf32>
    %35 = arith.addf %32, %34 : vector<8x256xf32>
    %36 = arith.mulf %32, %34 : vector<8x256xf32>
    %37 = arith.subf %35, %36 : vector<8x256xf32>
    %cst_27 = arith.constant 1.000000e+00 : f32
    %38 = vector.broadcast %cst_27 : f32 to vector<8x256xf32>
    %39 = arith.subf %38, %37 : vector<8x256xf32>
    %40 = arith.truncf %39 : vector<8x256xf32> to vector<8x256xbf16>
    %c0_28 = arith.constant 0 : index
    %c0_29 = arith.constant 0 : index
    %41 = vector.load %arg9[%c0_28, %c0_29] : memref<256x128xbf16, #tpu.memory_space<vmem>>, vector<256x128xbf16>
    %cst_30 = arith.constant dense<0.000000e+00> : vector<8x128xf32>
    %42 = tpu.matmul %40, %41, %cst_30 {dimension_numbers = #tpu.dot_dimension_numbers<[1], [0], [0], [1], [0, 0, 1, 1], [], []>} : vector<8x256xbf16>, vector<256x128xbf16>, vector<8x128xf32> -> vector<8x128xf32>
    %c0_31 = arith.constant 0 : index
    %c0_32 = arith.constant 0 : index
    %43 = vector.load %arg10[%c0_31, %c0_32] : memref<256x128xbf16, #tpu.memory_space<vmem>>, vector<256x128xbf16>
    %cst_33 = arith.constant dense<0.000000e+00> : vector<8x128xf32>
    %44 = tpu.matmul %40, %43, %cst_33 {dimension_numbers = #tpu.dot_dimension_numbers<[1], [0], [0], [1], [0, 0, 1, 1], [], []>} : vector<8x256xbf16>, vector<256x128xbf16>, vector<8x128xf32> -> vector<8x128xf32>
    %45 = arith.addf %42, %44 : vector<8x128xf32>
    %46 = arith.mulf %42, %44 : vector<8x128xf32>
    %47 = arith.subf %45, %46 : vector<8x128xf32>
    %cst_34 = arith.constant 1.000000e+00 : f32
    %48 = vector.broadcast %cst_34 : f32 to vector<8x128xf32>
    %49 = arith.subf %48, %47 : vector<8x128xf32>
    %c0_35 = arith.constant 0 : index
    %c0_36 = arith.constant 0 : index
    %50 = vector.load %arg11[%c0_35, %c0_36] : memref<8x128xf32, #tpu.memory_space<vmem>>, vector<8x128xf32>
    tpu.vector_store %arg11[%c0_35, %c0_36], %49 {strides = array<i32>} : memref<8x128xf32, #tpu.memory_space<vmem>>, vector<8x128xf32>,
    return
  }
}

</mosaic_0001>

<llo_original>
// kernel: tpu_custom_call.1
$region0: #{tpu_custom_call.1}
  #allocation0 [shape = 'u32[]', space=smem, size = 0x4, offset = 0x4, fixed_abs, tag = 'smem constant byte address 0x4 - core index']
  #allocation1 [shape = 'u32[144,128]{1,0:T(1,128)}', space=vmem, size = 0x12000, scoped, tag = 'internal scratch']
  %s0 = inlined_call_operand.hbm [shape: bf16[8,896], index: 0, kind: input, shape index: {}]
  %s1 = inlined_call_operand.hbm [shape: bf16[896,256], index: 1, kind: input, shape index: {}]
  %s2 = inlined_call_operand.hbm [shape: bf16[896,256], index: 2, kind: input, shape index: {}]
  %s3 = inlined_call_operand.hbm [shape: bf16[256,256], index: 3, kind: input, shape index: {}]
  %s4 = inlined_call_operand.hbm [shape: bf16[256,256], index: 4, kind: input, shape index: {}]
  %s5 = inlined_call_operand.hbm [shape: bf16[256,256], index: 5, kind: input, shape index: {}]
  %s6 = inlined_call_operand.hbm [shape: bf16[256,256], index: 6, kind: input, shape index: {}]
  %s7 = inlined_call_operand.hbm [shape: bf16[256,256], index: 7, kind: input, shape index: {}]
  %s8 = inlined_call_operand.hbm [shape: bf16[256,256], index: 8, kind: input, shape index: {}]
  %s9 = inlined_call_operand.hbm [shape: bf16[256,128], index: 9, kind: input, shape index: {}]
  %s10 = inlined_call_operand.hbm [shape: bf16[256,128], index: 10, kind: input, shape index: {}]
  %s11 = inlined_call_operand.hbm [shape: f32[8,128], index: 11, kind: output, shape index: {}]
  %s12 = sld [smem:[#allocation0]]
  $region98: #{tpu_custom_call.1} parent=0
    _
  %s14 = ssub.s32 1, %s12
  %s15 = scalar_select 0, %s14, %s12
  $region1: #{tpu_custom_call.1} parent=0
    #allocation2 [shape = 'u8[14336]{0}', space=vmem, size = 0x3800, scoped, tag = 'input window, operand 0, single buffered']
    #allocation3 [shape = 's32[1]{0}', space=sflag, size = 0x4, scoped, tag = 'scoped memory for tpu_custom_call.1']
    #allocation4 [shape = 's32[1]{0}', space=sflag, size = 0x4, scoped, tag = 'scoped memory for tpu_custom_call.1']
    #allocation5 [shape = 'u8[458752]{0}', space=vmem, size = 0x70000, scoped, tag = 'input window, operand 1, single buffered']
    #allocation6 [shape = 's32[1]{0}', space=sflag, size = 0x4, scoped, tag = 'scoped memory for tpu_custom_call.1']
    #allocation7 [shape = 'u8[458752]{0}', space=vmem, size = 0x70000, scoped, tag = 'input window, operand 2, single buffered']
    #allocation8 [shape = 'u8[131072]{0}', space=vmem, size = 0x20000, scoped, tag = 'input window, operand 3, single buffered']
    #allocation9 [shape = 's32[1]{0}', space=sflag, size = 0x4, scoped, tag = 'scoped memory for tpu_custom_call.1']
    #allocation10 [shape = 'u8[131072]{0}', space=vmem, size = 0x20000, scoped, tag = 'input window, operand 4, single buffered']
    #allocation11 [shape = 'u8[131072]{0}', space=vmem, size = 0x20000, scoped, tag = 'input window, operand 5, single buffered']
    #allocation12 [shape = 's32[1]{0}', space=sflag, size = 0x4, scoped, tag = 'scoped memory for tpu_custom_call.1']
    #allocation13 [shape = 'u8[131072]{0}', space=vmem, size = 0x20000, scoped, tag = 'input window, operand 6, single buffered']
    #allocation14 [shape = 'u8[131072]{0}', space=vmem, size = 0x20000, scoped, tag = 'input window, operand 7, single buffered']
    #allocation15 [shape = 's32[1]{0}', space=sflag, size = 0x4, scoped, tag = 'scoped memory for tpu_custom_call.1']
    #allocation16 [shape = 'u8[131072]{0}', space=vmem, size = 0x20000, scoped, tag = 'input window, operand 8, single buffered']
    #allocation17 [shape = 'u8[65536]{0}', space=vmem, size = 0x10000, scoped, tag = 'input window, operand 9, single buffered']
    #allocation18 [shape = 's32[1]{0}', space=sflag, size = 0x4, scoped, tag = 'scoped memory for tpu_custom_call.1']
    #allocation19 [shape = 'u8[65536]{0}', space=vmem, size = 0x10000, scoped, tag = 'input window, operand 10, single buffered']
    #allocation20 [shape = 'u8[4096]{0}', space=vmem, size = 0x1000, scoped, tag = 'output window, operand 0, single buffered']
    %16 = vsyncpa [#allocation3], 0
    %17 = vsyncpa [#allocation6], 0
    %18 = vsyncpa [#allocation9], 0
    %19 = vsyncpa [#allocation12], 0
    %20 = vsyncpa [#allocation15], 0
    %21 = vsyncpa [#allocation18], 0
    %22 = vsyncpa [#allocation4], 0
    // Predicated region
    $region2: #{tpu_custom_call.1} parent=1 // pred_check
      _
    $region3: #{tpu_custom_call.1} parent=1 // pred_check_branch
      %24 = sbr.rel (0) target = $region5
    $region4: #{tpu_custom_call.1} parent=1 // pred_region
      %s26 = ssub.s32 448, 448
      %27 = vsyncadd [#allocation3], %s26
      %s29 = sshll.u32 [#allocation2], 4
      %s30 = int_to_ptr.vmem [resolvable:$true] %s29
      %32 = dma.hbm_to_vmem [thread:$0]  %s0, 448, %s30, [#allocation3]
    $region5: #{tpu_custom_call.1} parent=1 // pred_fallthru
      _
    // Predicated region
    $region6: #{tpu_custom_call.1} parent=1 // pred_check
      _
    $region7: #{tpu_custom_call.1} parent=1 // pred_check_branch
      %34 = sbr.rel (0) target = $region9
    $region8: #{tpu_custom_call.1} parent=1 // pred_region
      %s36 = ssub.s32 14336, 14336
      %37 = vsyncadd [#allocation6], %s36
      %s38 = sshll.u32 [#allocation5], 4
      %s39 = int_to_ptr.vmem [resolvable:$true] %s38
      %44 = dma.hbm_to_vmem [thread:$0]  %s1, 14336, %s39, [#allocation6], 128, 128, 8
    $region9: #{tpu_custom_call.1} parent=1 // pred_fallthru
      _
    // Predicated region
    $region10: #{tpu_custom_call.1} parent=1 // pred_check
      _
    $region11: #{tpu_custom_call.1} parent=1 // pred_check_branch
      %46 = sbr.rel (0) target = $region13
    $region12: #{tpu_custom_call.1} parent=1 // pred_region
      %s48 = ssub.s32 14336, 14336
      %49 = vsyncadd [#allocation6], %s48
      %s50 = sshll.u32 [#allocation7], 4
      %s51 = int_to_ptr.vmem [resolvable:$true] %s50
      %56 = dma.hbm_to_vmem [thread:$0]  %s2, 14336, %s51, [#allocation6], 128, 128, 8
    $region13: #{tpu_custom_call.1} parent=1 // pred_fallthru
      _
    // Predicated region
    $region14: #{tpu_custom_call.1} parent=1 // pred_check
      _
    $region15: #{tpu_custom_call.1} parent=1 // pred_check_branch
      %58 = sbr.rel (0) target = $region17
    $region16: #{tpu_custom_call.1} parent=1 // pred_region
      %s60 = ssub.s32 4096, 4096
      %61 = vsyncadd [#allocation9], %s60
      %s62 = sshll.u32 [#allocation8], 4
      %s63 = int_to_ptr.vmem [resolvable:$true] %s62
      %68 = dma.hbm_to_vmem [thread:$0]  %s3, 4096, %s63, [#allocation9], 128, 128, 8
    $region17: #{tpu_custom_call.1} parent=1 // pred_fallthru
      _
    // Predicated region
    $region18: #{tpu_custom_call.1} parent=1 // pred_check
      _
    $region19: #{tpu_custom_call.1} parent=1 // pred_check_branch
      %70 = sbr.rel (0) target = $region21
    $region20: #{tpu_custom_call.1} parent=1 // pred_region
      %s72 = ssub.s32 4096, 4096
      %73 = vsyncadd [#allocation9], %s72
      %s74 = sshll.u32 [#allocation10], 4
      %s75 = int_to_ptr.vmem [resolvable:$true] %s74
      %80 = dma.hbm_to_vmem [thread:$0]  %s4, 4096, %s75, [#allocation9], 128, 128, 8
    $region21: #{tpu_custom_call.1} parent=1 // pred_fallthru
      _
    // Predicated region
    $region22: #{tpu_custom_call.1} parent=1 // pred_check
      _
    $region23: #{tpu_custom_call.1} parent=1 // pred_check_branch
      %82 = sbr.rel (0) target = $region25
    $region24: #{tpu_custom_call.1} parent=1 // pred_region
      %s84 = ssub.s32 4096, 4096
      %85 = vsyncadd [#allocation12], %s84
      %s86 = sshll.u32 [#allocation11], 4
      %s87 = int_to_ptr.vmem [resolvable:$true] %s86
      %92 = dma.hbm_to_vmem [thread:$0]  %s5, 4096, %s87, [#allocation12], 128, 128, 8
    $region25: #{tpu_custom_call.1} parent=1 // pred_fallthru
      _
    // Predicated region
    $region26: #{tpu_custom_call.1} parent=1 // pred_check
      _
    $region27: #{tpu_custom_call.1} parent=1 // pred_check_branch
      %94 = sbr.rel (0) target = $region29
    $region28: #{tpu_custom_call.1} parent=1 // pred_region
      %s96 = ssub.s32 4096, 4096
      %97 = vsyncadd [#allocation12], %s96
      %s98 = sshll.u32 [#allocation13], 4
      %s99 = int_to_ptr.vmem [resolvable:$true] %s98
      %104 = dma.hbm_to_vmem [thread:$0]  %s6, 4096, %s99, [#allocation12], 128, 128, 8
    $region29: #{tpu_custom_call.1} parent=1 // pred_fallthru
      _
    // Predicated region
    $region30: #{tpu_custom_call.1} parent=1 // pred_check
      _
    $region31: #{tpu_custom_call.1} parent=1 // pred_check_branch
      %106 = sbr.rel (0) target = $region33
    $region32: #{tpu_custom_call.1} parent=1 // pred_region
      %s108 = ssub.s32 4096, 4096
      %109 = vsyncadd [#allocation15], %s108
      %s110 = sshll.u32 [#allocation14], 4
      %s111 = int_to_ptr.vmem [resolvable:$true] %s110
      %116 = dma.hbm_to_vmem [thread:$0]  %s7, 4096, %s111, [#allocation15], 128, 128, 8
    $region33: #{tpu_custom_call.1} parent=1 // pred_fallthru
      _
    // Predicated region
    $region34: #{tpu_custom_call.1} parent=1 // pred_check
      _
    $region35: #{tpu_custom_call.1} parent=1 // pred_check_branch
      %118 = sbr.rel (0) target = $region37
    $region36: #{tpu_custom_call.1} parent=1 // pred_region
      %s120 = ssub.s32 4096, 4096
      %121 = vsyncadd [#allocation15], %s120
      %s122 = sshll.u32 [#allocation16], 4
      %s123 = int_to_ptr.vmem [resolvable:$true] %s122
      %128 = dma.hbm_to_vmem [thread:$0]  %s8, 4096, %s123, [#allocation15], 128, 128, 8
    $region37: #{tpu_custom_call.1} parent=1 // pred_fallthru
      _
    // Predicated region
    $region38: #{tpu_custom_call.1} parent=1 // pred_check
      _
    $region39: #{tpu_custom_call.1} parent=1 // pred_check_branch
      %130 = sbr.rel (0) target = $region41
    $region40: #{tpu_custom_call.1} parent=1 // pred_region
      %s132 = ssub.s32 2048, 2048
      %133 = vsyncadd [#allocation18], %s132
      %s134 = sshll.u32 [#allocation17], 4
      %s135 = int_to_ptr.vmem [resolvable:$true] %s134
      %140 = dma.hbm_to_vmem [thread:$0]  %s9, 2048, %s135, [#allocation18], 64, 64, 4
    $region41: #{tpu_custom_call.1} parent=1 // pred_fallthru
      _
    // Predicated region
    $region42: #{tpu_custom_call.1} parent=1 // pred_check
      _
    $region43: #{tpu_custom_call.1} parent=1 // pred_check_branch
      %142 = sbr.rel (0) target = $region45
    $region44: #{tpu_custom_call.1} parent=1 // pred_region
      %s144 = ssub.s32 2048, 2048
      %145 = vsyncadd [#allocation18], %s144
      %s146 = sshll.u32 [#allocation19], 4
      %s147 = int_to_ptr.vmem [resolvable:$true] %s146
      %152 = dma.hbm_to_vmem [thread:$0]  %s10, 2048, %s147, [#allocation18], 64, 64, 4
    $region45: #{tpu_custom_call.1} parent=1 // pred_fallthru
      _
    // Predicated region
    $region46: #{tpu_custom_call.1} parent=1 // pred_check
      _
    $region47: #{tpu_custom_call.1} parent=1 // pred_check_branch
      %154 = sbr.rel (0) target = $region49
    $region48: #{tpu_custom_call.1} parent=1 // pred_region
      %155 = dma.done [#allocation3], 448
    $region49: #{tpu_custom_call.1} parent=1 // pred_fallthru
      _
    // Predicated region
    $region50: #{tpu_custom_call.1} parent=1 // pred_check
      _
    $region51: #{tpu_custom_call.1} parent=1 // pred_check_branch
      %157 = sbr.rel (0) target = $region53
    $region52: #{tpu_custom_call.1} parent=1 // pred_region
      %158 = dma.done [#allocation6], 14336
    $region53: #{tpu_custom_call.1} parent=1 // pred_fallthru
      _
    // Predicated region
    $region54: #{tpu_custom_call.1} parent=1 // pred_check
      _
    $region55: #{tpu_custom_call.1} parent=1 // pred_check_branch
      %160 = sbr.rel (0) target = $region57
    $region56: #{tpu_custom_call.1} parent=1 // pred_region
      %161 = dma.done [#allocation6], 14336
    $region57: #{tpu_custom_call.1} parent=1 // pred_fallthru
      _
    // Predicated region
    $region58: #{tpu_custom_call.1} parent=1 // pred_check
      _
    $region59: #{tpu_custom_call.1} parent=1 // pred_check_branch
      %163 = sbr.rel (0) target = $region61
    $region60: #{tpu_custom_call.1} parent=1 // pred_region
      %164 = dma.done [#allocation9], 4096
    $region61: #{tpu_custom_call.1} parent=1 // pred_fallthru
      _
    // Predicated region
    $region62: #{tpu_custom_call.1} parent=1 // pred_check
      _
    $region63: #{tpu_custom_call.1} parent=1 // pred_check_branch
      %166 = sbr.rel (0) target = $region65
    $region64: #{tpu_custom_call.1} parent=1 // pred_region
      %167 = dma.done [#allocation9], 4096
    $region65: #{tpu_custom_call.1} parent=1 // pred_fallthru
      _
    // Predicated region
    $region66: #{tpu_custom_call.1} parent=1 // pred_check
      _
    $region67: #{tpu_custom_call.1} parent=1 // pred_check_branch
      %169 = sbr.rel (0) target = $region69
    $region68: #{tpu_custom_call.1} parent=1 // pred_region
      %170 = dma.done [#allocation12], 4096
    $region69: #{tpu_custom_call.1} parent=1 // pred_fallthru
      _
    // Predicated region
    $region70: #{tpu_custom_call.1} parent=1 // pred_check
      _
    $region71: #{tpu_custom_call.1} parent=1 // pred_check_branch
      %172 = sbr.rel (0) target = $region73
    $region72: #{tpu_custom_call.1} parent=1 // pred_region
      %173 = dma.done [#allocation12], 4096
    $region73: #{tpu_custom_call.1} parent=1 // pred_fallthru
      _
    // Predicated region
    $region74: #{tpu_custom_call.1} parent=1 // pred_check
      _
    $region75: #{tpu_custom_call.1} parent=1 // pred_check_branch
      %175 = sbr.rel (0) target = $region77
    $region76: #{tpu_custom_call.1} parent=1 // pred_region
      %176 = dma.done [#allocation15], 4096
    $region77: #{tpu_custom_call.1} parent=1 // pred_fallthru
      _
    // Predicated region
    $region78: #{tpu_custom_call.1} parent=1 // pred_check
      _
    $region79: #{tpu_custom_call.1} parent=1 // pred_check_branch
      %178 = sbr.rel (0) target = $region81
    $region80: #{tpu_custom_call.1} parent=1 // pred_region
      %179 = dma.done [#allocation15], 4096
    $region81: #{tpu_custom_call.1} parent=1 // pred_fallthru
      _
    // Predicated region
    $region82: #{tpu_custom_call.1} parent=1 // pred_check
      _
    $region83: #{tpu_custom_call.1} parent=1 // pred_check_branch
      %181 = sbr.rel (0) target = $region85
    $region84: #{tpu_custom_call.1} parent=1 // pred_region
      %182 = dma.done [#allocation18], 2048
    $region85: #{tpu_custom_call.1} parent=1 // pred_fallthru
      _
    // Predicated region
    $region86: #{tpu_custom_call.1} parent=1 // pred_check
      _
    $region87: #{tpu_custom_call.1} parent=1 // pred_check_branch
      %184 = sbr.rel (0) target = $region89
    $region88: #{tpu_custom_call.1} parent=1 // pred_region
      %185 = dma.done [#allocation18], 2048
    $region89: #{tpu_custom_call.1} parent=1 // pred_fallthru
      _
    %v187 = vld [vmem:[#allocation2] sm:$0xff]
    %v188 = vld [vmem:[#allocation2 + $0x8] sm:$0xff]
    %v189 = vld [vmem:[#allocation2 + $0x10] sm:$0xff]
    %v190 = vld [vmem:[#allocation2 + $0x18] sm:$0xf]
    %v191 = vld [vmem:[#allocation5] sm:$0xff]
    %v192 = vld [vmem:[#allocation5 + $0x8] sm:$0xff]
    %v193 = vld [vmem:[#allocation5 + $0x10] sm:$0xff]
    %v194 = vld [vmem:[#allocation5 + $0x18] sm:$0xff]
    %v195 = vld [vmem:[#allocation5 + $0x20] sm:$0xff]
    %v196 = vld [vmem:[#allocation5 + $0x28] sm:$0xff]
    %v197 = vld [vmem:[#allocation5 + $0x30] sm:$0xff]
    %v198 = vld [vmem:[#allocation5 + $0x38] sm:$0xff]
    %v199 = vld [vmem:[#allocation5 + $0x40] sm:$0xff]
    %v200 = vld [vmem:[#allocation5 + $0x48] sm:$0xff]
    %v201 = vld [vmem:[#allocation5 + $0x50] sm:$0xff]
    %v202 = vld [vmem:[#allocation5 + $0x58] sm:$0xff]
    %v203 = vld [vmem:[#allocation5 + $0x60] sm:$0xff]
    %v204 = vld [vmem:[#allocation5 + $0x68] sm:$0xff]
    %v205 = vld [vmem:[#allocation5 + $0x70] sm:$0xff]
    %v206 = vld [vmem:[#allocation5 + $0x78] sm:$0xff]
    %v207 = vld [vmem:[#allocation5 + $0x80] sm:$0xff]
    %v208 = vld [vmem:[#allocation5 + $0x88] sm:$0xff]
    %v209 = vld [vmem:[#allocation5 + $0x90] sm:$0xff]
    %v210 = vld [vmem:[#allocation5 + $0x98] sm:$0xff]
    %v211 = vld [vmem:[#allocation5 + $0xa0] sm:$0xff]
    %v212 = vld [vmem:[#allocation5 + $0xa8] sm:$0xff]
    %v213 = vld [vmem:[#allocation5 + $0xb0] sm:$0xff]
    %v214 = vld [vmem:[#allocation5 + $0xb8] sm:$0xff]
    %v215 = vld [vmem:[#allocation5 + $0xc0] sm:$0xff]
    %v216 = vld [vmem:[#allocation5 + $0xc8] sm:$0xff]
    %v217 = vld [vmem:[#allocation5 + $0xd0] sm:$0xff]
    %v218 = vld [vmem:[#allocation5 + $0xd8] sm:$0xff]
    %v219 = vld [vmem:[#allocation5 + $0xe0] sm:$0xff]
    %v220 = vld [vmem:[#allocation5 + $0xe8] sm:$0xff]
    %v221 = vld [vmem:[#allocation5 + $0xf0] sm:$0xff]
    %v222 = vld [vmem:[#allocation5 + $0xf8] sm:$0xff]
    %v223 = vld [vmem:[#allocation5 + $0x100] sm:$0xff]
    %v224 = vld [vmem:[#allocation5 + $0x108] sm:$0xff]
    %v225 = vld [vmem:[#allocation5 + $0x110] sm:$0xff]
    %v226 = vld [vmem:[#allocation5 + $0x118] sm:$0xff]
    %v227 = vld [vmem:[#allocation5 + $0x120] sm:$0xff]
    %v228 = vld [vmem:[#allocation5 + $0x128] sm:$0xff]
    %v229 = vld [vmem:[#allocation5 + $0x130] sm:$0xff]
    %v230 = vld [vmem:[#allocation5 + $0x138] sm:$0xff]
    %v231 = vld [vmem:[#allocation5 + $0x140] sm:$0xff]
    %v232 = vld [vmem:[#allocation5 + $0x148] sm:$0xff]
    %v233 = vld [vmem:[#allocation5 + $0x150] sm:$0xff]
    %v234 = vld [vmem:[#allocation5 + $0x158] sm:$0xff]
    %v235 = vld [vmem:[#allocation5 + $0x160] sm:$0xff]
    %v236 = vld [vmem:[#allocation5 + $0x168] sm:$0xff]
    %v237 = vld [vmem:[#allocation5 + $0x170] sm:$0xff]
    %v238 = vld [vmem:[#allocation5 + $0x178] sm:$0xff]
    %v239 = vld [vmem:[#allocation5 + $0x180] sm:$0xff]
    %v240 = vld [vmem:[#allocation5 + $0x188] sm:$0xff]
    %v241 = vld [vmem:[#allocation5 + $0x190] sm:$0xff]
    %v242 = vld [vmem:[#allocation5 + $0x198] sm:$0xff]
    %v243 = vld [vmem:[#allocation5 + $0x1a0] sm:$0xff]
    %v244 = vld [vmem:[#allocation5 + $0x1a8] sm:$0xff]
    %v245 = vld [vmem:[#allocation5 + $0x1b0] sm:$0xff]
    %v246 = vld [vmem:[#allocation5 + $0x1b8] sm:$0xff]
    %v247 = vld [vmem:[#allocation5 + $0x1c0] sm:$0xff]
    %v248 = vld [vmem:[#allocation5 + $0x1c8] sm:$0xff]
    %v249 = vld [vmem:[#allocation5 + $0x1d0] sm:$0xff]
    %v250 = vld [vmem:[#allocation5 + $0x1d8] sm:$0xff]
    %v251 = vld [vmem:[#allocation5 + $0x1e0] sm:$0xff]
    %v252 = vld [vmem:[#allocation5 + $0x1e8] sm:$0xff]
    %v253 = vld [vmem:[#allocation5 + $0x1f0] sm:$0xff]
    %v254 = vld [vmem:[#allocation5 + $0x1f8] sm:$0xff]
    %v255 = vld [vmem:[#allocation5 + $0x200] sm:$0xff]
    %v256 = vld [vmem:[#allocation5 + $0x208] sm:$0xff]
    %v257 = vld [vmem:[#allocation5 + $0x210] sm:$0xff]
    %v258 = vld [vmem:[#allocation5 + $0x218] sm:$0xff]
    %v259 = vld [vmem:[#allocation5 + $0x220] sm:$0xff]
    %v260 = vld [vmem:[#allocation5 + $0x228] sm:$0xff]
    %v261 = vld [vmem:[#allocation5 + $0x230] sm:$0xff]
    %v262 = vld [vmem:[#allocation5 + $0x238] sm:$0xff]
    %v263 = vld [vmem:[#allocation5 + $0x240] sm:$0xff]
    %v264 = vld [vmem:[#allocation5 + $0x248] sm:$0xff]
    %v265 = vld [vmem:[#allocation5 + $0x250] sm:$0xff]
    %v266 = vld [vmem:[#allocation5 + $0x258] sm:$0xff]
    %v267 = vld [vmem:[#allocation5 + $0x260] sm:$0xff]
    %v268 = vld [vmem:[#allocation5 + $0x268] sm:$0xff]
    %v269 = vld [vmem:[#allocation5 + $0x270] sm:$0xff]
    %v270 = vld [vmem:[#allocation5 + $0x278] sm:$0xff]
    %v271 = vld [vmem:[#allocation5 + $0x280] sm:$0xff]
    %v272 = vld [vmem:[#allocation5 + $0x288] sm:$0xff]
    %v273 = vld [vmem:[#allocation5 + $0x290] sm:$0xff]
    %v274 = vld [vmem:[#allocation5 + $0x298] sm:$0xff]
    %v275 = vld [vmem:[#allocation5 + $0x2a0] sm:$0xff]
    %v276 = vld [vmem:[#allocation5 + $0x2a8] sm:$0xff]
    %v277 = vld [vmem:[#allocation5 + $0x2b0] sm:$0xff]
    %v278 = vld [vmem:[#allocation5 + $0x2b8] sm:$0xff]
    %v279 = vld [vmem:[#allocation5 + $0x2c0] sm:$0xff]
    %v280 = vld [vmem:[#allocation5 + $0x2c8] sm:$0xff]
    %v281 = vld [vmem:[#allocation5 + $0x2d0] sm:$0xff]
    %v282 = vld [vmem:[#allocation5 + $0x2d8] sm:$0xff]
    %v283 = vld [vmem:[#allocation5 + $0x2e0] sm:$0xff]
    %v284 = vld [vmem:[#allocation5 + $0x2e8] sm:$0xff]
    %v285 = vld [vmem:[#allocation5 + $0x2f0] sm:$0xff]
    %v286 = vld [vmem:[#allocation5 + $0x2f8] sm:$0xff]
    %v287 = vld [vmem:[#allocation5 + $0x300] sm:$0xff]
    %v288 = vld [vmem:[#allocation5 + $0x308] sm:$0xff]
    %v289 = vld [vmem:[#allocation5 + $0x310] sm:$0xff]
    %v290 = vld [vmem:[#allocation5 + $0x318] sm:$0xff]
    %v291 = vld [vmem:[#allocation5 + $0x320] sm:$0xff]
    %v292 = vld [vmem:[#allocation5 + $0x328] sm:$0xff]
    %v293 = vld [vmem:[#allocation5 + $0x330] sm:$0xff]
    %v294 = vld [vmem:[#allocation5 + $0x338] sm:$0xff]
    %v295 = vld [vmem:[#allocation5 + $0x340] sm:$0xff]
    %v296 = vld [vmem:[#allocation5 + $0x348] sm:$0xff]
    %v297 = vld [vmem:[#allocation5 + $0x350] sm:$0xff]
    %v298 = vld [vmem:[#allocation5 + $0x358] sm:$0xff]
    %v299 = vld [vmem:[#allocation5 + $0x360] sm:$0xff]
    %v300 = vld [vmem:[#allocation5 + $0x368] sm:$0xff]
    %v301 = vld [vmem:[#allocation5 + $0x370] sm:$0xff]
    %v302 = vld [vmem:[#allocation5 + $0x378] sm:$0xff]
    %v307 = vunpack.c.l.b16 %v187
    %v308 = vunpack.c.h.b16 %v187
    %v309 = vunpack.c.l.b16 %v188
    %v310 = vunpack.c.h.b16 %v188
    %v311 = vunpack.c.l.b16 %v189
    %v312 = vunpack.c.h.b16 %v189
    %v313 = vunpack.c.l.b16 %v190
    %v314 = vpack.c.b16 %v307, %v307
    %v315 = vpack.c.b16 %v308, %v308
    %v316 = vpack.c.b16 %v309, %v309
    %v317 = vpack.c.b16 %v310, %v310
    %v318 = vpack.c.b16 %v311, %v311
    %v319 = vpack.c.b16 %v312, %v312
    %v320 = vpack.c.b16 %v313, %v313
    %v440 = vunpack.c.l.b16 %v191
    %v441 = vunpack.c.h.b16 %v191
    %v442 = vunpack.c.l.b16 %v192
    %v443 = vunpack.c.h.b16 %v192
    %v444 = vunpack.c.l.b16 %v193
    %v445 = vunpack.c.h.b16 %v193
    %v446 = vunpack.c.l.b16 %v194
    %v447 = vunpack.c.h.b16 %v194
    %v448 = vunpack.c.l.b16 %v195
    %v449 = vunpack.c.h.b16 %v195
    %v450 = vunpack.c.l.b16 %v196
    %v451 = vunpack.c.h.b16 %v196
    %v452 = vunpack.c.l.b16 %v197
    %v453 = vunpack.c.h.b16 %v197
    %v454 = vunpack.c.l.b16 %v198
    %v455 = vunpack.c.h.b16 %v198
    %v456 = vunpack.c.l.b16 %v199
    %v457 = vunpack.c.h.b16 %v199
    %v458 = vunpack.c.l.b16 %v200
    %v459 = vunpack.c.h.b16 %v200
    %v460 = vunpack.c.l.b16 %v201
    %v461 = vunpack.c.h.b16 %v201
    %v462 = vunpack.c.l.b16 %v202
    %v463 = vunpack.c.h.b16 %v202
    %v464 = vunpack.c.l.b16 %v203
    %v465 = vunpack.c.h.b16 %v203
    %v466 = vunpack.c.l.b16 %v204
    %v467 = vunpack.c.h.b16 %v204
    %v468 = vunpack.c.l.b16 %v205
    %v469 = vunpack.c.h.b16 %v205
    %v470 = vunpack.c.l.b16 %v206
    %v471 = vunpack.c.h.b16 %v206
    %v472 = vunpack.c.l.b16 %v207
    %v473 = vunpack.c.h.b16 %v207
    %v474 = vunpack.c.l.b16 %v208
    %v475 = vunpack.c.h.b16 %v208
    %v476 = vunpack.c.l.b16 %v209
    %v477 = vunpack.c.h.b16 %v209
    %v478 = vunpack.c.l.b16 %v210
    %v479 = vunpack.c.h.b16 %v210
    %v480 = vunpack.c.l.b16 %v211
    %v481 = vunpack.c.h.b16 %v211
    %v482 = vunpack.c.l.b16 %v212
    %v483 = vunpack.c.h.b16 %v212
    %v484 = vunpack.c.l.b16 %v213
    %v485 = vunpack.c.h.b16 %v213
    %v486 = vunpack.c.l.b16 %v214
    %v487 = vunpack.c.h.b16 %v214
    %v488 = vunpack.c.l.b16 %v215
    %v489 = vunpack.c.h.b16 %v215
    %v490 = vunpack.c.l.b16 %v216
    %v491 = vunpack.c.h.b16 %v216
    %v492 = vunpack.c.l.b16 %v217
    %v493 = vunpack.c.h.b16 %v217
    %v494 = vunpack.c.l.b16 %v218
    %v495 = vunpack.c.h.b16 %v218
    %v496 = vunpack.c.l.b16 %v219
    %v497 = vunpack.c.h.b16 %v219
    %v498 = vunpack.c.l.b16 %v220
    %v499 = vunpack.c.h.b16 %v220
    %v500 = vunpack.c.l.b16 %v221
    %v501 = vunpack.c.h.b16 %v221
    %v502 = vunpack.c.l.b16 %v222
    %v503 = vunpack.c.h.b16 %v222
    %v504 = vunpack.c.l.b16 %v223
    %v505 = vunpack.c.h.b16 %v223
    %v506 = vunpack.c.l.b16 %v224
    %v507 = vunpack.c.h.b16 %v224
    %v508 = vunpack.c.l.b16 %v225
    %v509 = vunpack.c.h.b16 %v225
    %v510 = vunpack.c.l.b16 %v226
    %v511 = vunpack.c.h.b16 %v226
    %v512 = vunpack.c.l.b16 %v227
    %v513 = vunpack.c.h.b16 %v227
    %v514 = vunpack.c.l.b16 %v228
    %v515 = vunpack.c.h.b16 %v228
    %v516 = vunpack.c.l.b16 %v229
    %v517 = vunpack.c.h.b16 %v229
    %v518 = vunpack.c.l.b16 %v230
    %v519 = vunpack.c.h.b16 %v230
    %v520 = vunpack.c.l.b16 %v231
    %v521 = vunpack.c.h.b16 %v231
    %v522 = vunpack.c.l.b16 %v232
    %v523 = vunpack.c.h.b16 %v232
    %v524 = vunpack.c.l.b16 %v233
    %v525 = vunpack.c.h.b16 %v233
    %v526 = vunpack.c.l.b16 %v234
    %v527 = vunpack.c.h.b16 %v234
    %v528 = vunpack.c.l.b16 %v235
    %v529 = vunpack.c.h.b16 %v235
    %v530 = vunpack.c.l.b16 %v236
    %v531 = vunpack.c.h.b16 %v236
    %v532 = vunpack.c.l.b16 %v237
    %v533 = vunpack.c.h.b16 %v237
    %v534 = vunpack.c.l.b16 %v238
    %v535 = vunpack.c.h.b16 %v238
    %v536 = vunpack.c.l.b16 %v239
    %v537 = vunpack.c.h.b16 %v239
    %v538 = vunpack.c.l.b16 %v240
    %v539 = vunpack.c.h.b16 %v240
    %v540 = vunpack.c.l.b16 %v241
    %v541 = vunpack.c.h.b16 %v241
    %v542 = vunpack.c.l.b16 %v242
    %v543 = vunpack.c.h.b16 %v242
    %v544 = vunpack.c.l.b16 %v243
    %v545 = vunpack.c.h.b16 %v243
    %v546 = vunpack.c.l.b16 %v244
    %v547 = vunpack.c.h.b16 %v244
    %v548 = vunpack.c.l.b16 %v245
    %v549 = vunpack.c.h.b16 %v245
    %v550 = vunpack.c.l.b16 %v246
    %v551 = vunpack.c.h.b16 %v246
    %v552 = vunpack.c.l.b16 %v247
    %v553 = vunpack.c.h.b16 %v247
    %v554 = vunpack.c.l.b16 %v248
    %v555 = vunpack.c.h.b16 %v248
    %v556 = vunpack.c.l.b16 %v249
    %v557 = vunpack.c.h.b16 %v249
    %v558 = vunpack.c.l.b16 %v250
    %v559 = vunpack.c.h.b16 %v250
    %v560 = vunpack.c.l.b16 %v251
    %v561 = vunpack.c.h.b16 %v251
    %v562 = vunpack.c.l.b16 %v252
    %v563 = vunpack.c.h.b16 %v252
    %v564 = vunpack.c.l.b16 %v253
    %v565 = vunpack.c.h.b16 %v253
    %v566 = vunpack.c.l.b16 %v254
    %v567 = vunpack.c.h.b16 %v254
    %v568 = vunpack.c.l.b16 %v255
    %v569 = vunpack.c.h.b16 %v255
    %v570 = vunpack.c.l.b16 %v256
    %v571 = vunpack.c.h.b16 %v256
    %v572 = vunpack.c.l.b16 %v257
    %v573 = vunpack.c.h.b16 %v257
    %v574 = vunpack.c.l.b16 %v258
    %v575 = vunpack.c.h.b16 %v258
    %v576 = vunpack.c.l.b16 %v259
    %v577 = vunpack.c.h.b16 %v259
    %v578 = vunpack.c.l.b16 %v260
    %v579 = vunpack.c.h.b16 %v260
    %v580 = vunpack.c.l.b16 %v261
    %v581 = vunpack.c.h.b16 %v261
    %v582 = vunpack.c.l.b16 %v262
    %v583 = vunpack.c.h.b16 %v262
    %v584 = vunpack.c.l.b16 %v263
    %v585 = vunpack.c.h.b16 %v263
    %v586 = vunpack.c.l.b16 %v264
    %v587 = vunpack.c.h.b16 %v264
    %v588 = vunpack.c.l.b16 %v265
    %v589 = vunpack.c.h.b16 %v265
    %v590 = vunpack.c.l.b16 %v266
    %v591 = vunpack.c.h.b16 %v266
    %v592 = vunpack.c.l.b16 %v267
    %v593 = vunpack.c.h.b16 %v267
    %v594 = vunpack.c.l.b16 %v268
    %v595 = vunpack.c.h.b16 %v268
    %v596 = vunpack.c.l.b16 %v269
    %v597 = vunpack.c.h.b16 %v269
    %v598 = vunpack.c.l.b16 %v270
    %v599 = vunpack.c.h.b16 %v270
    %v600 = vunpack.c.l.b16 %v271
    %v601 = vunpack.c.h.b16 %v271
    %v602 = vunpack.c.l.b16 %v272
    %v603 = vunpack.c.h.b16 %v272
    %v604 = vunpack.c.l.b16 %v273
    %v605 = vunpack.c.h.b16 %v273
    %v606 = vunpack.c.l.b16 %v274
    %v607 = vunpack.c.h.b16 %v274
    %v608 = vunpack.c.l.b16 %v275
    %v609 = vunpack.c.h.b16 %v275
    %v610 = vunpack.c.l.b16 %v276
    %v611 = vunpack.c.h.b16 %v276
    %v612 = vunpack.c.l.b16 %v277
    %v613 = vunpack.c.h.b16 %v277
    %v614 = vunpack.c.l.b16 %v278
    %v615 = vunpack.c.h.b16 %v278
    %v616 = vunpack.c.l.b16 %v279
    %v617 = vunpack.c.h.b16 %v279
    %v618 = vunpack.c.l.b16 %v280
    %v619 = vunpack.c.h.b16 %v280
    %v620 = vunpack.c.l.b16 %v281
    %v621 = vunpack.c.h.b16 %v281
    %v622 = vunpack.c.l.b16 %v282
    %v623 = vunpack.c.h.b16 %v282
    %v624 = vunpack.c.l.b16 %v283
    %v625 = vunpack.c.h.b16 %v283
    %v626 = vunpack.c.l.b16 %v284
    %v627 = vunpack.c.h.b16 %v284
    %v628 = vunpack.c.l.b16 %v285
    %v629 = vunpack.c.h.b16 %v285
    %v630 = vunpack.c.l.b16 %v286
    %v631 = vunpack.c.h.b16 %v286
    %v632 = vunpack.c.l.b16 %v287
    %v633 = vunpack.c.h.b16 %v287
    %v634 = vunpack.c.l.b16 %v288
    %v635 = vunpack.c.h.b16 %v288
    %v636 = vunpack.c.l.b16 %v289
    %v637 = vunpack.c.h.b16 %v289
    %v638 = vunpack.c.l.b16 %v290
    %v639 = vunpack.c.h.b16 %v290
    %v640 = vunpack.c.l.b16 %v291
    %v641 = vunpack.c.h.b16 %v291
    %v642 = vunpack.c.l.b16 %v292
    %v643 = vunpack.c.h.b16 %v292
    %v644 = vunpack.c.l.b16 %v293
    %v645 = vunpack.c.h.b16 %v293
    %v646 = vunpack.c.l.b16 %v294
    %v647 = vunpack.c.h.b16 %v294
    %v648 = vunpack.c.l.b16 %v295
    %v649 = vunpack.c.h.b16 %v295
    %v650 = vunpack.c.l.b16 %v296
    %v651 = vunpack.c.h.b16 %v296
    %v652 = vunpack.c.l.b16 %v297
    %v653 = vunpack.c.h.b16 %v297
    %v654 = vunpack.c.l.b16 %v298
    %v655 = vunpack.c.h.b16 %v298
    %v656 = vunpack.c.l.b16 %v299
    %v657 = vunpack.c.h.b16 %v299
    %v658 = vunpack.c.l.b16 %v300
    %v659 = vunpack.c.h.b16 %v300
    %v660 = vunpack.c.l.b16 %v301
    %v661 = vunpack.c.h.b16 %v301
    %v662 = vunpack.c.l.b16 %v302
    %v663 = vunpack.c.h.b16 %v302
    %v664 = vpack.c.b16 %v442, %v440
    %v665 = vpack.c.b16 %v443, %v441
    %v666 = vpack.c.b16 %v446, %v444
    %v667 = vpack.c.b16 %v447, %v445
    %v668 = vpack.c.b16 %v450, %v448
    %v669 = vpack.c.b16 %v451, %v449
    %v670 = vpack.c.b16 %v454, %v452
    %v671 = vpack.c.b16 %v455, %v453
    %v672 = vpack.c.b16 %v458, %v456
    %v673 = vpack.c.b16 %v459, %v457
    %v674 = vpack.c.b16 %v462, %v460
    %v675 = vpack.c.b16 %v463, %v461
    %v676 = vpack.c.b16 %v466, %v464
    %v677 = vpack.c.b16 %v467, %v465
    %v678 = vpack.c.b16 %v470, %v468
    %v679 = vpack.c.b16 %v471, %v469
    %v680 = vpack.c.b16 %v474, %v472
    %v681 = vpack.c.b16 %v475, %v473
    %v682 = vpack.c.b16 %v478, %v476
    %v683 = vpack.c.b16 %v479, %v477
    %v684 = vpack.c.b16 %v482, %v480
    %v685 = vpack.c.b16 %v483, %v481
    %v686 = vpack.c.b16 %v486, %v484
    %v687 = vpack.c.b16 %v487, %v485
    %v688 = vpack.c.b16 %v490, %v488
    %v689 = vpack.c.b16 %v491, %v489
    %v690 = vpack.c.b16 %v494, %v492
    %v691 = vpack.c.b16 %v495, %v493
    %v692 = vpack.c.b16 %v498, %v496
    %v693 = vpack.c.b16 %v499, %v497
    %v694 = vpack.c.b16 %v502, %v500
    %v695 = vpack.c.b16 %v503, %v501
    %v696 = vpack.c.b16 %v506, %v504
    %v697 = vpack.c.b16 %v507, %v505
    %v698 = vpack.c.b16 %v510, %v508
    %v699 = vpack.c.b16 %v511, %v509
    %v700 = vpack.c.b16 %v514, %v512
    %v701 = vpack.c.b16 %v515, %v513
    %v702 = vpack.c.b16 %v518, %v516
    %v703 = vpack.c.b16 %v519, %v517
    %v704 = vpack.c.b16 %v522, %v520
    %v705 = vpack.c.b16 %v523, %v521
    %v706 = vpack.c.b16 %v526, %v524
    %v707 = vpack.c.b16 %v527, %v525
    %v708 = vpack.c.b16 %v530, %v528
    %v709 = vpack.c.b16 %v531, %v529
    %v710 = vpack.c.b16 %v534, %v532
    %v711 = vpack.c.b16 %v535, %v533
    %v712 = vpack.c.b16 %v538, %v536
    %v713 = vpack.c.b16 %v539, %v537
    %v714 = vpack.c.b16 %v542, %v540
    %v715 = vpack.c.b16 %v543, %v541
    %v716 = vpack.c.b16 %v546, %v544
    %v717 = vpack.c.b16 %v547, %v545
    %v718 = vpack.c.b16 %v550, %v548
    %v719 = vpack.c.b16 %v551, %v549
    %v720 = vpack.c.b16 %v554, %v552
    %v721 = vpack.c.b16 %v555, %v553
    %v722 = vpack.c.b16 %v558, %v556
    %v723 = vpack.c.b16 %v559, %v557
    %v724 = vpack.c.b16 %v562, %v560
    %v725 = vpack.c.b16 %v563, %v561
    %v726 = vpack.c.b16 %v566, %v564
    %v727 = vpack.c.b16 %v567, %v565
    %v728 = vpack.c.b16 %v570, %v568
    %v729 = vpack.c.b16 %v571, %v569
    %v730 = vpack.c.b16 %v574, %v572
    %v731 = vpack.c.b16 %v575, %v573
    %v732 = vpack.c.b16 %v578, %v576
    %v733 = vpack.c.b16 %v579, %v577
    %v734 = vpack.c.b16 %v582, %v580
    %v735 = vpack.c.b16 %v583, %v581
    %v736 = vpack.c.b16 %v586, %v584
    %v737 = vpack.c.b16 %v587, %v585
    %v738 = vpack.c.b16 %v590, %v588
    %v739 = vpack.c.b16 %v591, %v589
    %v740 = vpack.c.b16 %v594, %v592
    %v741 = vpack.c.b16 %v595, %v593
    %v742 = vpack.c.b16 %v598, %v596
    %v743 = vpack.c.b16 %v599, %v597
    %v744 = vpack.c.b16 %v602, %v600
    %v745 = vpack.c.b16 %v603, %v601
    %v746 = vpack.c.b16 %v606, %v604
    %v747 = vpack.c.b16 %v607, %v605
    %v748 = vpack.c.b16 %v610, %v608
    %v749 = vpack.c.b16 %v611, %v609
    %v750 = vpack.c.b16 %v614, %v612
    %v751 = vpack.c.b16 %v615, %v613
    %v752 = vpack.c.b16 %v618, %v616
    %v753 = vpack.c.b16 %v619, %v617
    %v754 = vpack.c.b16 %v622, %v620
    %v755 = vpack.c.b16 %v623, %v621
    %v756 = vpack.c.b16 %v626, %v624
    %v757 = vpack.c.b16 %v627, %v625
    %v758 = vpack.c.b16 %v630, %v628
    %v759 = vpack.c.b16 %v631, %v629
    %v760 = vpack.c.b16 %v634, %v632
    %v761 = vpack.c.b16 %v635, %v633
    %v762 = vpack.c.b16 %v638, %v636
    %v763 = vpack.c.b16 %v639, %v637
    %v764 = vpack.c.b16 %v642, %v640
    %v765 = vpack.c.b16 %v643, %v641
    %v766 = vpack.c.b16 %v646, %v644
    %v767 = vpack.c.b16 %v647, %v645
    %v768 = vpack.c.b16 %v650, %v648
    %v769 = vpack.c.b16 %v651, %v649
    %v770 = vpack.c.b16 %v654, %v652
    %v771 = vpack.c.b16 %v655, %v653
    %v772 = vpack.c.b16 %v658, %v656
    %v773 = vpack.c.b16 %v659, %v657
    %v774 = vpack.c.b16 %v662, %v660
    %v775 = vpack.c.b16 %v663, %v661
    %888 = vmatprep.subr.bf16.mxu0 %v665
    %889 = vmatpush1.bf16.msra.mxu0 %v664
    %890 = vmatprep.subr.bf16.mxu0 %v667
    %891 = vmatpush1.bf16.msra.mxu0 %v666
    %892 = vmatprep.subr.bf16.mxu0 %v669
    %893 = vmatpush1.bf16.msra.mxu0 %v668
    %894 = vmatprep.subr.bf16.mxu0 %v671
    %895 = vmatpush1.bf16.msra.mxu0 %v670
    %896 = vmatprep.subr.bf16.mxu0 %v673
    %897 = vmatpush1.bf16.msra.mxu0 %v672
    %898 = vmatprep.subr.bf16.mxu0 %v675
    %899 = vmatpush1.bf16.msra.mxu0 %v674
    %900 = vmatprep.subr.bf16.mxu0 %v677
    %901 = vmatpush1.bf16.msra.mxu0 %v676
    %902 = vmatprep.subr.bf16.mxu0 %v679
    %903 = vmatpush1.bf16.msra.mxu0 %v678
    %904 = vmatprep.subr.bf16.mxu0 %v681
    %905 = vmatpush1.bf16.msra.mxu0 %v680
    %906 = vmatprep.subr.bf16.mxu0 %v683
    %907 = vmatpush1.bf16.msra.mxu0 %v682
    %908 = vmatprep.subr.bf16.mxu0 %v685
    %909 = vmatpush1.bf16.msra.mxu0 %v684
    %910 = vmatprep.subr.bf16.mxu0 %v687
    %911 = vmatpush1.bf16.msra.mxu0 %v686
    %912 = vmatprep.subr.bf16.mxu0 %v689
    %913 = vmatpush1.bf16.msra.mxu0 %v688
    %914 = vmatprep.subr.bf16.mxu0 %v691
    %915 = vmatpush1.bf16.msra.mxu0 %v690
    %916 = vmatprep.subr.bf16.mxu0 %v693
    %917 = vmatpush1.bf16.msra.mxu0 %v692
    %918 = vmatprep.subr.bf16.mxu0 %v695
    %919 = vmatpush1.bf16.msra.mxu0 %v694
    %920 = vmatprep.mubr.bf16.mxu0 %v315
    %921 = vmatmul.mubr.bf16.gmra.mrb[0].mxu0 %v314
    %v922 = vpop.f32.mrb[0].mxu0
    %v923 = vadd.f32 0.0, %v922
    %v924 = vpop.f32.mrb[0].mxu0
    %v925 = vadd.f32 0.0, %v924
    %v926 = vpop.f32.mrb[0].mxu0
    %v927 = vpop.f32.mrb[0].mxu0
    %928 = vdwg.mxu0
    %929 = vmatprep.subr.bf16.mxu0 %v697
    %930 = vmatpush1.bf16.msra.mxu0 %v696
    %931 = vmatprep.subr.bf16.mxu0 %v699
    %932 = vmatpush1.bf16.msra.mxu0 %v698
    %933 = vmatprep.subr.bf16.mxu0 %v701
    %934 = vmatpush1.bf16.msra.mxu0 %v700
    %935 = vmatprep.subr.bf16.mxu0 %v703
    %936 = vmatpush1.bf16.msra.mxu0 %v702
    %937 = vmatprep.subr.bf16.mxu0 %v705
    %938 = vmatpush1.bf16.msra.mxu0 %v704
    %939 = vmatprep.subr.bf16.mxu0 %v707
    %940 = vmatpush1.bf16.msra.mxu0 %v706
    %941 = vmatprep.subr.bf16.mxu0 %v709
    %942 = vmatpush1.bf16.msra.mxu0 %v708
    %943 = vmatprep.subr.bf16.mxu0 %v711
    %944 = vmatpush1.bf16.msra.mxu0 %v710
    %945 = vmatprep.subr.bf16.mxu0 %v713
    %946 = vmatpush1.bf16.msra.mxu0 %v712
    %947 = vmatprep.subr.bf16.mxu0 %v715
    %948 = vmatpush1.bf16.msra.mxu0 %v714
    %949 = vmatprep.subr.bf16.mxu0 %v717
    %950 = vmatpush1.bf16.msra.mxu0 %v716
    %951 = vmatprep.subr.bf16.mxu0 %v719
    %952 = vmatpush1.bf16.msra.mxu0 %v718
    %953 = vmatprep.subr.bf16.mxu0 %v721
    %954 = vmatpush1.bf16.msra.mxu0 %v720
    %955 = vmatprep.subr.bf16.mxu0 %v723
    %956 = vmatpush1.bf16.msra.mxu0 %v722
    %957 = vmatprep.subr.bf16.mxu0 %v725
    %958 = vmatpush1.bf16.msra.mxu0 %v724
    %959 = vmatprep.subr.bf16.mxu0 %v727
    %960 = vmatpush1.bf16.msra.mxu0 %v726
    %961 = vmatprep.mubr.bf16.mxu0 %v317
    %962 = vmatmul.mubr.bf16.gmra.mrb[0].mxu0 %v316
    %v963 = vpop.f32.mrb[0].mxu0
    %v964 = vadd.f32 %v923, %v963
    %v965 = vpop.f32.mrb[0].mxu0
    %v966 = vadd.f32 %v925, %v965
    %v967 = vpop.f32.mrb[0].mxu0
    %v968 = vpop.f32.mrb[0].mxu0
    %969 = vdwg.mxu0
    %970 = vmatprep.subr.bf16.mxu0 %v729
    %971 = vmatpush1.bf16.msra.mxu0 %v728
    %972 = vmatprep.subr.bf16.mxu0 %v731
    %973 = vmatpush1.bf16.msra.mxu0 %v730
    %974 = vmatprep.subr.bf16.mxu0 %v733
    %975 = vmatpush1.bf16.msra.mxu0 %v732
    %976 = vmatprep.subr.bf16.mxu0 %v735
    %977 = vmatpush1.bf16.msra.mxu0 %v734
    %978 = vmatprep.subr.bf16.mxu0 %v737
    %979 = vmatpush1.bf16.msra.mxu0 %v736
    %980 = vmatprep.subr.bf16.mxu0 %v739
    %981 = vmatpush1.bf16.msra.mxu0 %v738
    %982 = vmatprep.subr.bf16.mxu0 %v741
    %983 = vmatpush1.bf16.msra.mxu0 %v740
    %984 = vmatprep.subr.bf16.mxu0 %v743
    %985 = vmatpush1.bf16.msra.mxu0 %v742
    %986 = vmatprep.subr.bf16.mxu0 %v745
    %987 = vmatpush1.bf16.msra.mxu0 %v744
    %988 = vmatprep.subr.bf16.mxu0 %v747
    %989 = vmatpush1.bf16.msra.mxu0 %v746
    %990 = vmatprep.subr.bf16.mxu0 %v749
    %991 = vmatpush1.bf16.msra.mxu0 %v748
    %992 = vmatprep.subr.bf16.mxu0 %v751
    %993 = vmatpush1.bf16.msra.mxu0 %v750
    %994 = vmatprep.subr.bf16.mxu0 %v753
    %995 = vmatpush1.bf16.msra.mxu0 %v752
    %996 = vmatprep.subr.bf16.mxu0 %v755
    %997 = vmatpush1.bf16.msra.mxu0 %v754
    %998 = vmatprep.subr.bf16.mxu0 %v757
    %999 = vmatpush1.bf16.msra.mxu0 %v756
    %1000 = vmatprep.subr.bf16.mxu0 %v759
    %1001 = vmatpush1.bf16.msra.mxu0 %v758
    %1002 = vmatprep.mubr.bf16.mxu0 %v319
    %1003 = vmatmul.mubr.bf16.gmra.mrb[0].mxu0 %v318
    %v1004 = vpop.f32.mrb[0].mxu0
    %v1005 = vadd.f32 %v964, %v1004
    %v1006 = vpop.f32.mrb[0].mxu0
    %v1007 = vadd.f32 %v966, %v1006
    %v1008 = vpop.f32.mrb[0].mxu0
    %v1009 = vpop.f32.mrb[0].mxu0
    %1010 = vdwg.mxu0
    %1011 = vmatprep.subr.bf16.mxu0 %v761
    %1012 = vmatpush1.bf16.msra.mxu0 %v760
    %1013 = vmatprep.subr.bf16.mxu0 %v763
    %1014 = vmatpush1.bf16.msra.mxu0 %v762
    %1015 = vmatprep.subr.bf16.mxu0 %v765
    %1016 = vmatpush1.bf16.msra.mxu0 %v764
    %1017 = vmatprep.subr.bf16.mxu0 %v767
    %1018 = vmatpush1.bf16.msra.mxu0 %v766
    %1019 = vmatprep.subr.bf16.mxu0 %v769
    %1020 = vmatpush1.bf16.msra.mxu0 %v768
    %1021 = vmatprep.subr.bf16.mxu0 %v771
    %1022 = vmatpush1.bf16.msra.mxu0 %v770
    %1023 = vmatprep.subr.bf16.mxu0 %v773
    %1024 = vmatpush1.bf16.msra.mxu0 %v772
    %1025 = vmatprep.subr.bf16.mxu0 %v775
    %1026 = vmatpush1.bf16.msra.mxu0 %v774
    %1027 = vmatprep.subr.bf16.mxu0 0
    %1028 = vmatpush1.bf16.msra.mxu0 0
    %1029 = vmatprep.subr.bf16.mxu0 0
    %1030 = vmatpush1.bf16.msra.mxu0 0
    %1031 = vmatprep.subr.bf16.mxu0 0
    %1032 = vmatpush1.bf16.msra.mxu0 0
    %1033 = vmatprep.subr.bf16.mxu0 0
    %1034 = vmatpush1.bf16.msra.mxu0 0
    %1035 = vmatprep.subr.bf16.mxu0 0
    %1036 = vmatpush1.bf16.msra.mxu0 0
    %1037 = vmatprep.subr.bf16.mxu0 0
    %1038 = vmatpush1.bf16.msra.mxu0 0
    %1039 = vmatprep.subr.bf16.mxu0 0
    %1040 = vmatpush1.bf16.msra.mxu0 0
    %1041 = vmatprep.subr.bf16.mxu0 0
    %1042 = vmatpush1.bf16.msra.mxu0 0
    %1043 = vmatprep.mubr.bf16.mxu0 0
    %1044 = vmatmul.mubr.bf16.gmra.mrb[0].mxu0 %v320
    %v1045 = vpop.f32.mrb[0].mxu0
    %v1046 = vadd.f32 %v1005, %v1045
    %v1047 = vpop.f32.mrb[0].mxu0
    %v1048 = vadd.f32 %v1007, %v1047
    %v1049 = vpop.f32.mrb[0].mxu0
    %v1050 = vpop.f32.mrb[0].mxu0
    %1051 = vdwg.mxu0
    %v1052 = vld [vmem:[#allocation7] sm:$0xff]
    %v1053 = vld [vmem:[#allocation7 + $0x8] sm:$0xff]
    %v1054 = vld [vmem:[#allocation7 + $0x10] sm:$0xff]
    %v1055 = vld [vmem:[#allocation7 + $0x18] sm:$0xff]
    %v1056 = vld [vmem:[#allocation7 + $0x20] sm:$0xff]
    %v1057 = vld [vmem:[#allocation7 + $0x28] sm:$0xff]
    %v1058 = vld [vmem:[#allocation7 + $0x30] sm:$0xff]
    %v1059 = vld [vmem:[#allocation7 + $0x38] sm:$0xff]
    %v1060 = vld [vmem:[#allocation7 + $0x40] sm:$0xff]
    %v1061 = vld [vmem:[#allocation7 + $0x48] sm:$0xff]
    %v1062 = vld [vmem:[#allocation7 + $0x50] sm:$0xff]
    %v1063 = vld [vmem:[#allocation7 + $0x58] sm:$0xff]
    %v1064 = vld [vmem:[#allocation7 + $0x60] sm:$0xff]
    %v1065 = vld [vmem:[#allocation7 + $0x68] sm:$0xff]
    %v1066 = vld [vmem:[#allocation7 + $0x70] sm:$0xff]
    %v1067 = vld [vmem:[#allocation7 + $0x78] sm:$0xff]
    %v1068 = vld [vmem:[#allocation7 + $0x80] sm:$0xff]
    %v1069 = vld [vmem:[#allocation7 + $0x88] sm:$0xff]
    %v1070 = vld [vmem:[#allocation7 + $0x90] sm:$0xff]
    %v1071 = vld [vmem:[#allocation7 + $0x98] sm:$0xff]
    %v1072 = vld [vmem:[#allocation7 + $0xa0] sm:$0xff]
    %v1073 = vld [vmem:[#allocation7 + $0xa8] sm:$0xff]
    %v1074 = vld [vmem:[#allocation7 + $0xb0] sm:$0xff]
    %v1075 = vld [vmem:[#allocation7 + $0xb8] sm:$0xff]
    %v1076 = vld [vmem:[#allocation7 + $0xc0] sm:$0xff]
    %v1077 = vld [vmem:[#allocation7 + $0xc8] sm:$0xff]
    %v1078 = vld [vmem:[#allocation7 + $0xd0] sm:$0xff]
    %v1079 = vld [vmem:[#allocation7 + $0xd8] sm:$0xff]
    %v1080 = vld [vmem:[#allocation7 + $0xe0] sm:$0xff]
    %v1081 = vld [vmem:[#allocation7 + $0xe8] sm:$0xff]
    %v1082 = vld [vmem:[#allocation7 + $0xf0] sm:$0xff]
    %v1083 = vld [vmem:[#allocation7 + $0xf8] sm:$0xff]
    %v1084 = vld [vmem:[#allocation7 + $0x100] sm:$0xff]
    %v1085 = vld [vmem:[#allocation7 + $0x108] sm:$0xff]
    %v1086 = vld [vmem:[#allocation7 + $0x110] sm:$0xff]
    %v1087 = vld [vmem:[#allocation7 + $0x118] sm:$0xff]
    %v1088 = vld [vmem:[#allocation7 + $0x120] sm:$0xff]
    %v1089 = vld [vmem:[#allocation7 + $0x128] sm:$0xff]
    %v1090 = vld [vmem:[#allocation7 + $0x130] sm:$0xff]
    %v1091 = vld [vmem:[#allocation7 + $0x138] sm:$0xff]
    %v1092 = vld [vmem:[#allocation7 + $0x140] sm:$0xff]
    %v1093 = vld [vmem:[#allocation7 + $0x148] sm:$0xff]
    %v1094 = vld [vmem:[#allocation7 + $0x150] sm:$0xff]
    %v1095 = vld [vmem:[#allocation7 + $0x158] sm:$0xff]
    %v1096 = vld [vmem:[#allocation7 + $0x160] sm:$0xff]
    %v1097 = vld [vmem:[#allocation7 + $0x168] sm:$0xff]
    %v1098 = vld [vmem:[#allocation7 + $0x170] sm:$0xff]
    %v1099 = vld [vmem:[#allocation7 + $0x178] sm:$0xff]
    %v1100 = vld [vmem:[#allocation7 + $0x180] sm:$0xff]
    %v1101 = vld [vmem:[#allocation7 + $0x188] sm:$0xff]
    %v1102 = vld [vmem:[#allocation7 + $0x190] sm:$0xff]
    %v1103 = vld [vmem:[#allocation7 + $0x198] sm:$0xff]
    %v1104 = vld [vmem:[#allocation7 + $0x1a0] sm:$0xff]
    %v1105 = vld [vmem:[#allocation7 + $0x1a8] sm:$0xff]
    %v1106 = vld [vmem:[#allocation7 + $0x1b0] sm:$0xff]
    %v1107 = vld [vmem:[#allocation7 + $0x1b8] sm:$0xff]
    %v1108 = vld [vmem:[#allocation7 + $0x1c0] sm:$0xff]
    %v1109 = vld [vmem:[#allocation7 + $0x1c8] sm:$0xff]
    %v1110 = vld [vmem:[#allocation7 + $0x1d0] sm:$0xff]
    %v1111 = vld [vmem:[#allocation7 + $0x1d8] sm:$0xff]
    %v1112 = vld [vmem:[#allocation7 + $0x1e0] sm:$0xff]
    %v1113 = vld [vmem:[#allocation7 + $0x1e8] sm:$0xff]
    %v1114 = vld [vmem:[#allocation7 + $0x1f0] sm:$0xff]
    %v1115 = vld [vmem:[#allocation7 + $0x1f8] sm:$0xff]
    %v1116 = vld [vmem:[#allocation7 + $0x200] sm:$0xff]
    %v1117 = vld [vmem:[#allocation7 + $0x208] sm:$0xff]
    %v1118 = vld [vmem:[#allocation7 + $0x210] sm:$0xff]
    %v1119 = vld [vmem:[#allocation7 + $0x218] sm:$0xff]
    %v1120 = vld [vmem:[#allocation7 + $0x220] sm:$0xff]
    %v1121 = vld [vmem:[#allocation7 + $0x228] sm:$0xff]
    %v1122 = vld [vmem:[#allocation7 + $0x230] sm:$0xff]
    %v1123 = vld [vmem:[#allocation7 + $0x238] sm:$0xff]
    %v1124 = vld [vmem:[#allocation7 + $0x240] sm:$0xff]
    %v1125 = vld [vmem:[#allocation7 + $0x248] sm:$0xff]
    %v1126 = vld [vmem:[#allocation7 + $0x250] sm:$0xff]
    %v1127 = vld [vmem:[#allocation7 + $0x258] sm:$0xff]
    %v1128 = vld [vmem:[#allocation7 + $0x260] sm:$0xff]
    %v1129 = vld [vmem:[#allocation7 + $0x268] sm:$0xff]
    %v1130 = vld [vmem:[#allocation7 + $0x270] sm:$0xff]
    %v1131 = vld [vmem:[#allocation7 + $0x278] sm:$0xff]
    %v1132 = vld [vmem:[#allocation7 + $0x280] sm:$0xff]
    %v1133 = vld [vmem:[#allocation7 + $0x288] sm:$0xff]
    %v1134 = vld [vmem:[#allocation7 + $0x290] sm:$0xff]
    %v1135 = vld [vmem:[#allocation7 + $0x298] sm:$0xff]
    %v1136 = vld [vmem:[#allocation7 + $0x2a0] sm:$0xff]
    %v1137 = vld [vmem:[#allocation7 + $0x2a8] sm:$0xff]
    %v1138 = vld [vmem:[#allocation7 + $0x2b0] sm:$0xff]
    %v1139 = vld [vmem:[#allocation7 + $0x2b8] sm:$0xff]
    %v1140 = vld [vmem:[#allocation7 + $0x2c0] sm:$0xff]
    %v1141 = vld [vmem:[#allocation7 + $0x2c8] sm:$0xff]
    %v1142 = vld [vmem:[#allocation7 + $0x2d0] sm:$0xff]
    %v1143 = vld [vmem:[#allocation7 + $0x2d8] sm:$0xff]
    %v1144 = vld [vmem:[#allocation7 + $0x2e0] sm:$0xff]
    %v1145 = vld [vmem:[#allocation7 + $0x2e8] sm:$0xff]
    %v1146 = vld [vmem:[#allocation7 + $0x2f0] sm:$0xff]
    %v1147 = vld [vmem:[#allocation7 + $0x2f8] sm:$0xff]
    %v1148 = vld [vmem:[#allocation7 + $0x300] sm:$0xff]
    %v1149 = vld [vmem:[#allocation7 + $0x308] sm:$0xff]
    %v1150 = vld [vmem:[#allocation7 + $0x310] sm:$0xff]
    %v1151 = vld [vmem:[#allocation7 + $0x318] sm:$0xff]
    %v1152 = vld [vmem:[#allocation7 + $0x320] sm:$0xff]
    %v1153 = vld [vmem:[#allocation7 + $0x328] sm:$0xff]
    %v1154 = vld [vmem:[#allocation7 + $0x330] sm:$0xff]
    %v1155 = vld [vmem:[#allocation7 + $0x338] sm:$0xff]
    %v1156 = vld [vmem:[#allocation7 + $0x340] sm:$0xff]
    %v1157 = vld [vmem:[#allocation7 + $0x348] sm:$0xff]
    %v1158 = vld [vmem:[#allocation7 + $0x350] sm:$0xff]
    %v1159 = vld [vmem:[#allocation7 + $0x358] sm:$0xff]
    %v1160 = vld [vmem:[#allocation7 + $0x360] sm:$0xff]
    %v1161 = vld [vmem:[#allocation7 + $0x368] sm:$0xff]
    %v1162 = vld [vmem:[#allocation7 + $0x370] sm:$0xff]
    %v1163 = vld [vmem:[#allocation7 + $0x378] sm:$0xff]
    %v1276 = vunpack.c.l.b16 %v1052
    %v1277 = vunpack.c.h.b16 %v1052
    %v1278 = vunpack.c.l.b16 %v1053
    %v1279 = vunpack.c.h.b16 %v1053
    %v1280 = vunpack.c.l.b16 %v1054
    %v1281 = vunpack.c.h.b16 %v1054
    %v1282 = vunpack.c.l.b16 %v1055
    %v1283 = vunpack.c.h.b16 %v1055
    %v1284 = vunpack.c.l.b16 %v1056
    %v1285 = vunpack.c.h.b16 %v1056
    %v1286 = vunpack.c.l.b16 %v1057
    %v1287 = vunpack.c.h.b16 %v1057
    %v1288 = vunpack.c.l.b16 %v1058
    %v1289 = vunpack.c.h.b16 %v1058
    %v1290 = vunpack.c.l.b16 %v1059
    %v1291 = vunpack.c.h.b16 %v1059
    %v1292 = vunpack.c.l.b16 %v1060
    %v1293 = vunpack.c.h.b16 %v1060
    %v1294 = vunpack.c.l.b16 %v1061
    %v1295 = vunpack.c.h.b16 %v1061
    %v1296 = vunpack.c.l.b16 %v1062
    %v1297 = vunpack.c.h.b16 %v1062
    %v1298 = vunpack.c.l.b16 %v1063
    %v1299 = vunpack.c.h.b16 %v1063
    %v1300 = vunpack.c.l.b16 %v1064
    %v1301 = vunpack.c.h.b16 %v1064
    %v1302 = vunpack.c.l.b16 %v1065
    %v1303 = vunpack.c.h.b16 %v1065
    %v1304 = vunpack.c.l.b16 %v1066
    %v1305 = vunpack.c.h.b16 %v1066
    %v1306 = vunpack.c.l.b16 %v1067
    %v1307 = vunpack.c.h.b16 %v1067
    %v1308 = vunpack.c.l.b16 %v1068
    %v1309 = vunpack.c.h.b16 %v1068
    %v1310 = vunpack.c.l.b16 %v1069
    %v1311 = vunpack.c.h.b16 %v1069
    %v1312 = vunpack.c.l.b16 %v1070
    %v1313 = vunpack.c.h.b16 %v1070
    %v1314 = vunpack.c.l.b16 %v1071
    %v1315 = vunpack.c.h.b16 %v1071
    %v1316 = vunpack.c.l.b16 %v1072
    %v1317 = vunpack.c.h.b16 %v1072
    %v1318 = vunpack.c.l.b16 %v1073
    %v1319 = vunpack.c.h.b16 %v1073
    %v1320 = vunpack.c.l.b16 %v1074
    %v1321 = vunpack.c.h.b16 %v1074
    %v1322 = vunpack.c.l.b16 %v1075
    %v1323 = vunpack.c.h.b16 %v1075
    %v1324 = vunpack.c.l.b16 %v1076
    %v1325 = vunpack.c.h.b16 %v1076
    %v1326 = vunpack.c.l.b16 %v1077
    %v1327 = vunpack.c.h.b16 %v1077
    %v1328 = vunpack.c.l.b16 %v1078
    %v1329 = vunpack.c.h.b16 %v1078
    %v1330 = vunpack.c.l.b16 %v1079
    %v1331 = vunpack.c.h.b16 %v1079
    %v1332 = vunpack.c.l.b16 %v1080
    %v1333 = vunpack.c.h.b16 %v1080
    %v1334 = vunpack.c.l.b16 %v1081
    %v1335 = vunpack.c.h.b16 %v1081
    %v1336 = vunpack.c.l.b16 %v1082
    %v1337 = vunpack.c.h.b16 %v1082
    %v1338 = vunpack.c.l.b16 %v1083
    %v1339 = vunpack.c.h.b16 %v1083
    %v1340 = vunpack.c.l.b16 %v1084
    %v1341 = vunpack.c.h.b16 %v1084
    %v1342 = vunpack.c.l.b16 %v1085
    %v1343 = vunpack.c.h.b16 %v1085
    %v1344 = vunpack.c.l.b16 %v1086
    %v1345 = vunpack.c.h.b16 %v1086
    %v1346 = vunpack.c.l.b16 %v1087
    %v1347 = vunpack.c.h.b16 %v1087
    %v1348 = vunpack.c.l.b16 %v1088
    %v1349 = vunpack.c.h.b16 %v1088
    %v1350 = vunpack.c.l.b16 %v1089
    %v1351 = vunpack.c.h.b16 %v1089
    %v1352 = vunpack.c.l.b16 %v1090
    %v1353 = vunpack.c.h.b16 %v1090
    %v1354 = vunpack.c.l.b16 %v1091
    %v1355 = vunpack.c.h.b16 %v1091
    %v1356 = vunpack.c.l.b16 %v1092
    %v1357 = vunpack.c.h.b16 %v1092
    %v1358 = vunpack.c.l.b16 %v1093
    %v1359 = vunpack.c.h.b16 %v1093
    %v1360 = vunpack.c.l.b16 %v1094
    %v1361 = vunpack.c.h.b16 %v1094
    %v1362 = vunpack.c.l.b16 %v1095
    %v1363 = vunpack.c.h.b16 %v1095
    %v1364 = vunpack.c.l.b16 %v1096
    %v1365 = vunpack.c.h.b16 %v1096
    %v1366 = vunpack.c.l.b16 %v1097
    %v1367 = vunpack.c.h.b16 %v1097
    %v1368 = vunpack.c.l.b16 %v1098
    %v1369 = vunpack.c.h.b16 %v1098
    %v1370 = vunpack.c.l.b16 %v1099
    %v1371 = vunpack.c.h.b16 %v1099
    %v1372 = vunpack.c.l.b16 %v1100
    %v1373 = vunpack.c.h.b16 %v1100
    %v1374 = vunpack.c.l.b16 %v1101
    %v1375 = vunpack.c.h.b16 %v1101
    %v1376 = vunpack.c.l.b16 %v1102
    %v1377 = vunpack.c.h.b16 %v1102
    %v1378 = vunpack.c.l.b16 %v1103
    %v1379 = vunpack.c.h.b16 %v1103
    %v1380 = vunpack.c.l.b16 %v1104
    %v1381 = vunpack.c.h.b16 %v1104
    %v1382 = vunpack.c.l.b16 %v1105
    %v1383 = vunpack.c.h.b16 %v1105
    %v1384 = vunpack.c.l.b16 %v1106
    %v1385 = vunpack.c.h.b16 %v1106
    %v1386 = vunpack.c.l.b16 %v1107
    %v1387 = vunpack.c.h.b16 %v1107
    %v1388 = vunpack.c.l.b16 %v1108
    %v1389 = vunpack.c.h.b16 %v1108
    %v1390 = vunpack.c.l.b16 %v1109
    %v1391 = vunpack.c.h.b16 %v1109
    %v1392 = vunpack.c.l.b16 %v1110
    %v1393 = vunpack.c.h.b16 %v1110
    %v1394 = vunpack.c.l.b16 %v1111
    %v1395 = vunpack.c.h.b16 %v1111
    %v1396 = vunpack.c.l.b16 %v1112
    %v1397 = vunpack.c.h.b16 %v1112
    %v1398 = vunpack.c.l.b16 %v1113
    %v1399 = vunpack.c.h.b16 %v1113
    %v1400 = vunpack.c.l.b16 %v1114
    %v1401 = vunpack.c.h.b16 %v1114
    %v1402 = vunpack.c.l.b16 %v1115
    %v1403 = vunpack.c.h.b16 %v1115
    %v1404 = vunpack.c.l.b16 %v1116
    %v1405 = vunpack.c.h.b16 %v1116
    %v1406 = vunpack.c.l.b16 %v1117
    %v1407 = vunpack.c.h.b16 %v1117
    %v1408 = vunpack.c.l.b16 %v1118
    %v1409 = vunpack.c.h.b16 %v1118
    %v1410 = vunpack.c.l.b16 %v1119
    %v1411 = vunpack.c.h.b16 %v1119
    %v1412 = vunpack.c.l.b16 %v1120
    %v1413 = vunpack.c.h.b16 %v1120
    %v1414 = vunpack.c.l.b16 %v1121
    %v1415 = vunpack.c.h.b16 %v1121
    %v1416 = vunpack.c.l.b16 %v1122
    %v1417 = vunpack.c.h.b16 %v1122
    %v1418 = vunpack.c.l.b16 %v1123
    %v1419 = vunpack.c.h.b16 %v1123
    %v1420 = vunpack.c.l.b16 %v1124
    %v1421 = vunpack.c.h.b16 %v1124
    %v1422 = vunpack.c.l.b16 %v1125
    %v1423 = vunpack.c.h.b16 %v1125
    %v1424 = vunpack.c.l.b16 %v1126
    %v1425 = vunpack.c.h.b16 %v1126
    %v1426 = vunpack.c.l.b16 %v1127
    %v1427 = vunpack.c.h.b16 %v1127
    %v1428 = vunpack.c.l.b16 %v1128
    %v1429 = vunpack.c.h.b16 %v1128
    %v1430 = vunpack.c.l.b16 %v1129
    %v1431 = vunpack.c.h.b16 %v1129
    %v1432 = vunpack.c.l.b16 %v1130
    %v1433 = vunpack.c.h.b16 %v1130
    %v1434 = vunpack.c.l.b16 %v1131
    %v1435 = vunpack.c.h.b16 %v1131
    %v1436 = vunpack.c.l.b16 %v1132
    %v1437 = vunpack.c.h.b16 %v1132
    %v1438 = vunpack.c.l.b16 %v1133
    %v1439 = vunpack.c.h.b16 %v1133
    %v1440 = vunpack.c.l.b16 %v1134
    %v1441 = vunpack.c.h.b16 %v1134
    %v1442 = vunpack.c.l.b16 %v1135
    %v1443 = vunpack.c.h.b16 %v1135
    %v1444 = vunpack.c.l.b16 %v1136
    %v1445 = vunpack.c.h.b16 %v1136
    %v1446 = vunpack.c.l.b16 %v1137
    %v1447 = vunpack.c.h.b16 %v1137
    %v1448 = vunpack.c.l.b16 %v1138
    %v1449 = vunpack.c.h.b16 %v1138
    %v1450 = vunpack.c.l.b16 %v1139
    %v1451 = vunpack.c.h.b16 %v1139
    %v1452 = vunpack.c.l.b16 %v1140
    %v1453 = vunpack.c.h.b16 %v1140
    %v1454 = vunpack.c.l.b16 %v1141
    %v1455 = vunpack.c.h.b16 %v1141
    %v1456 = vunpack.c.l.b16 %v1142
    %v1457 = vunpack.c.h.b16 %v1142
    %v1458 = vunpack.c.l.b16 %v1143
    %v1459 = vunpack.c.h.b16 %v1143
    %v1460 = vunpack.c.l.b16 %v1144
    %v1461 = vunpack.c.h.b16 %v1144
    %v1462 = vunpack.c.l.b16 %v1145
    %v1463 = vunpack.c.h.b16 %v1145
    %v1464 = vunpack.c.l.b16 %v1146
    %v1465 = vunpack.c.h.b16 %v1146
    %v1466 = vunpack.c.l.b16 %v1147
    %v1467 = vunpack.c.h.b16 %v1147
    %v1468 = vunpack.c.l.b16 %v1148
    %v1469 = vunpack.c.h.b16 %v1148
    %v1470 = vunpack.c.l.b16 %v1149
    %v1471 = vunpack.c.h.b16 %v1149
    %v1472 = vunpack.c.l.b16 %v1150
    %v1473 = vunpack.c.h.b16 %v1150
    %v1474 = vunpack.c.l.b16 %v1151
    %v1475 = vunpack.c.h.b16 %v1151
    %v1476 = vunpack.c.l.b16 %v1152
    %v1477 = vunpack.c.h.b16 %v1152
    %v1478 = vunpack.c.l.b16 %v1153
    %v1479 = vunpack.c.h.b16 %v1153
    %v1480 = vunpack.c.l.b16 %v1154
    %v1481 = vunpack.c.h.b16 %v1154
    %v1482 = vunpack.c.l.b16 %v1155
    %v1483 = vunpack.c.h.b16 %v1155
    %v1484 = vunpack.c.l.b16 %v1156
    %v1485 = vunpack.c.h.b16 %v1156
    %v1486 = vunpack.c.l.b16 %v1157
    %v1487 = vunpack.c.h.b16 %v1157
    %v1488 = vunpack.c.l.b16 %v1158
    %v1489 = vunpack.c.h.b16 %v1158
    %v1490 = vunpack.c.l.b16 %v1159
    %v1491 = vunpack.c.h.b16 %v1159
    %v1492 = vunpack.c.l.b16 %v1160
    %v1493 = vunpack.c.h.b16 %v1160
    %v1494 = vunpack.c.l.b16 %v1161
    %v1495 = vunpack.c.h.b16 %v1161
    %v1496 = vunpack.c.l.b16 %v1162
    %v1497 = vunpack.c.h.b16 %v1162
    %v1498 = vunpack.c.l.b16 %v1163
    %v1499 = vunpack.c.h.b16 %v1163
    %v1500 = vpack.c.b16 %v1278, %v1276
    %v1501 = vpack.c.b16 %v1279, %v1277
    %v1502 = vpack.c.b16 %v1282, %v1280
    %v1503 = vpack.c.b16 %v1283, %v1281
    %v1504 = vpack.c.b16 %v1286, %v1284
    %v1505 = vpack.c.b16 %v1287, %v1285
    %v1506 = vpack.c.b16 %v1290, %v1288
    %v1507 = vpack.c.b16 %v1291, %v1289
    %v1508 = vpack.c.b16 %v1294, %v1292
    %v1509 = vpack.c.b16 %v1295, %v1293
    %v1510 = vpack.c.b16 %v1298, %v1296
    %v1511 = vpack.c.b16 %v1299, %v1297
    %v1512 = vpack.c.b16 %v1302, %v1300
    %v1513 = vpack.c.b16 %v1303, %v1301
    %v1514 = vpack.c.b16 %v1306, %v1304
    %v1515 = vpack.c.b16 %v1307, %v1305
    %v1516 = vpack.c.b16 %v1310, %v1308
    %v1517 = vpack.c.b16 %v1311, %v1309
    %v1518 = vpack.c.b16 %v1314, %v1312
    %v1519 = vpack.c.b16 %v1315, %v1313
    %v1520 = vpack.c.b16 %v1318, %v1316
    %v1521 = vpack.c.b16 %v1319, %v1317
    %v1522 = vpack.c.b16 %v1322, %v1320
    %v1523 = vpack.c.b16 %v1323, %v1321
    %v1524 = vpack.c.b16 %v1326, %v1324
    %v1525 = vpack.c.b16 %v1327, %v1325
    %v1526 = vpack.c.b16 %v1330, %v1328
    %v1527 = vpack.c.b16 %v1331, %v1329
    %v1528 = vpack.c.b16 %v1334, %v1332
    %v1529 = vpack.c.b16 %v1335, %v1333
    %v1530 = vpack.c.b16 %v1338, %v1336
    %v1531 = vpack.c.b16 %v1339, %v1337
    %v1532 = vpack.c.b16 %v1342, %v1340
    %v1533 = vpack.c.b16 %v1343, %v1341
    %v1534 = vpack.c.b16 %v1346, %v1344
    %v1535 = vpack.c.b16 %v1347, %v1345
    %v1536 = vpack.c.b16 %v1350, %v1348
    %v1537 = vpack.c.b16 %v1351, %v1349
    %v1538 = vpack.c.b16 %v1354, %v1352
    %v1539 = vpack.c.b16 %v1355, %v1353
    %v1540 = vpack.c.b16 %v1358, %v1356
    %v1541 = vpack.c.b16 %v1359, %v1357
    %v1542 = vpack.c.b16 %v1362, %v1360
    %v1543 = vpack.c.b16 %v1363, %v1361
    %v1544 = vpack.c.b16 %v1366, %v1364
    %v1545 = vpack.c.b16 %v1367, %v1365
    %v1546 = vpack.c.b16 %v1370, %v1368
    %v1547 = vpack.c.b16 %v1371, %v1369
    %v1548 = vpack.c.b16 %v1374, %v1372
    %v1549 = vpack.c.b16 %v1375, %v1373
    %v1550 = vpack.c.b16 %v1378, %v1376
    %v1551 = vpack.c.b16 %v1379, %v1377
    %v1552 = vpack.c.b16 %v1382, %v1380
    %v1553 = vpack.c.b16 %v1383, %v1381
    %v1554 = vpack.c.b16 %v1386, %v1384
    %v1555 = vpack.c.b16 %v1387, %v1385
    %v1556 = vpack.c.b16 %v1390, %v1388
    %v1557 = vpack.c.b16 %v1391, %v1389
    %v1558 = vpack.c.b16 %v1394, %v1392
    %v1559 = vpack.c.b16 %v1395, %v1393
    %v1560 = vpack.c.b16 %v1398, %v1396
    %v1561 = vpack.c.b16 %v1399, %v1397
    %v1562 = vpack.c.b16 %v1402, %v1400
    %v1563 = vpack.c.b16 %v1403, %v1401
    %v1564 = vpack.c.b16 %v1406, %v1404
    %v1565 = vpack.c.b16 %v1407, %v1405
    %v1566 = vpack.c.b16 %v1410, %v1408
    %v1567 = vpack.c.b16 %v1411, %v1409
    %v1568 = vpack.c.b16 %v1414, %v1412
    %v1569 = vpack.c.b16 %v1415, %v1413
    %v1570 = vpack.c.b16 %v1418, %v1416
    %v1571 = vpack.c.b16 %v1419, %v1417
    %v1572 = vpack.c.b16 %v1422, %v1420
    %v1573 = vpack.c.b16 %v1423, %v1421
    %v1574 = vpack.c.b16 %v1426, %v1424
    %v1575 = vpack.c.b16 %v1427, %v1425
    %v1576 = vpack.c.b16 %v1430, %v1428
    %v1577 = vpack.c.b16 %v1431, %v1429
    %v1578 = vpack.c.b16 %v1434, %v1432
    %v1579 = vpack.c.b16 %v1435, %v1433
    %v1580 = vpack.c.b16 %v1438, %v1436
    %v1581 = vpack.c.b16 %v1439, %v1437
    %v1582 = vpack.c.b16 %v1442, %v1440
    %v1583 = vpack.c.b16 %v1443, %v1441
    %v1584 = vpack.c.b16 %v1446, %v1444
    %v1585 = vpack.c.b16 %v1447, %v1445
    %v1586 = vpack.c.b16 %v1450, %v1448
    %v1587 = vpack.c.b16 %v1451, %v1449
    %v1588 = vpack.c.b16 %v1454, %v1452
    %v1589 = vpack.c.b16 %v1455, %v1453
    %v1590 = vpack.c.b16 %v1458, %v1456
    %v1591 = vpack.c.b16 %v1459, %v1457
    %v1592 = vpack.c.b16 %v1462, %v1460
    %v1593 = vpack.c.b16 %v1463, %v1461
    %v1594 = vpack.c.b16 %v1466, %v1464
    %v1595 = vpack.c.b16 %v1467, %v1465
    %v1596 = vpack.c.b16 %v1470, %v1468
    %v1597 = vpack.c.b16 %v1471, %v1469
    %v1598 = vpack.c.b16 %v1474, %v1472
    %v1599 = vpack.c.b16 %v1475, %v1473
    %v1600 = vpack.c.b16 %v1478, %v1476
    %v1601 = vpack.c.b16 %v1479, %v1477
    %v1602 = vpack.c.b16 %v1482, %v1480
    %v1603 = vpack.c.b16 %v1483, %v1481
    %v1604 = vpack.c.b16 %v1486, %v1484
    %v1605 = vpack.c.b16 %v1487, %v1485
    %v1606 = vpack.c.b16 %v1490, %v1488
    %v1607 = vpack.c.b16 %v1491, %v1489
    %v1608 = vpack.c.b16 %v1494, %v1492
    %v1609 = vpack.c.b16 %v1495, %v1493
    %v1610 = vpack.c.b16 %v1498, %v1496
    %v1611 = vpack.c.b16 %v1499, %v1497
    %1724 = vmatprep.subr.bf16.mxu0 %v1501
    %1725 = vmatpush1.bf16.msra.mxu0 %v1500
    %1726 = vmatprep.subr.bf16.mxu0 %v1503
    %1727 = vmatpush1.bf16.msra.mxu0 %v1502
    %1728 = vmatprep.subr.bf16.mxu0 %v1505
    %1729 = vmatpush1.bf16.msra.mxu0 %v1504
    %1730 = vmatprep.subr.bf16.mxu0 %v1507
    %1731 = vmatpush1.bf16.msra.mxu0 %v1506
    %1732 = vmatprep.subr.bf16.mxu0 %v1509
    %1733 = vmatpush1.bf16.msra.mxu0 %v1508
    %1734 = vmatprep.subr.bf16.mxu0 %v1511
    %1735 = vmatpush1.bf16.msra.mxu0 %v1510
    %1736 = vmatprep.subr.bf16.mxu0 %v1513
    %1737 = vmatpush1.bf16.msra.mxu0 %v1512
    %1738 = vmatprep.subr.bf16.mxu0 %v1515
    %1739 = vmatpush1.bf16.msra.mxu0 %v1514
    %1740 = vmatprep.subr.bf16.mxu0 %v1517
    %1741 = vmatpush1.bf16.msra.mxu0 %v1516
    %1742 = vmatprep.subr.bf16.mxu0 %v1519
    %1743 = vmatpush1.bf16.msra.mxu0 %v1518
    %1744 = vmatprep.subr.bf16.mxu0 %v1521
    %1745 = vmatpush1.bf16.msra.mxu0 %v1520
    %1746 = vmatprep.subr.bf16.mxu0 %v1523
    %1747 = vmatpush1.bf16.msra.mxu0 %v1522
    %1748 = vmatprep.subr.bf16.mxu0 %v1525
    %1749 = vmatpush1.bf16.msra.mxu0 %v1524
    %1750 = vmatprep.subr.bf16.mxu0 %v1527
    %1751 = vmatpush1.bf16.msra.mxu0 %v1526
    %1752 = vmatprep.subr.bf16.mxu0 %v1529
    %1753 = vmatpush1.bf16.msra.mxu0 %v1528
    %1754 = vmatprep.subr.bf16.mxu0 %v1531
    %1755 = vmatpush1.bf16.msra.mxu0 %v1530
    %1756 = vmatprep.mubr.bf16.mxu0 %v315
    %1757 = vmatmul.mubr.bf16.gmra.mrb[0].mxu0 %v314
    %v1758 = vpop.f32.mrb[0].mxu0
    %v1759 = vadd.f32 0.0, %v1758
    %v1760 = vpop.f32.mrb[0].mxu0
    %v1761 = vadd.f32 0.0, %v1760
    %v1762 = vpop.f32.mrb[0].mxu0
    %v1763 = vpop.f32.mrb[0].mxu0
    %1764 = vdwg.mxu0
    %1765 = vmatprep.subr.bf16.mxu0 %v1533
    %1766 = vmatpush1.bf16.msra.mxu0 %v1532
    %1767 = vmatprep.subr.bf16.mxu0 %v1535
    %1768 = vmatpush1.bf16.msra.mxu0 %v1534
    %1769 = vmatprep.subr.bf16.mxu0 %v1537
    %1770 = vmatpush1.bf16.msra.mxu0 %v1536
    %1771 = vmatprep.subr.bf16.mxu0 %v1539
    %1772 = vmatpush1.bf16.msra.mxu0 %v1538
    %1773 = vmatprep.subr.bf16.mxu0 %v1541
    %1774 = vmatpush1.bf16.msra.mxu0 %v1540
    %1775 = vmatprep.subr.bf16.mxu0 %v1543
    %1776 = vmatpush1.bf16.msra.mxu0 %v1542
    %1777 = vmatprep.subr.bf16.mxu0 %v1545
    %1778 = vmatpush1.bf16.msra.mxu0 %v1544
    %1779 = vmatprep.subr.bf16.mxu0 %v1547
    %1780 = vmatpush1.bf16.msra.mxu0 %v1546
    %1781 = vmatprep.subr.bf16.mxu0 %v1549
    %1782 = vmatpush1.bf16.msra.mxu0 %v1548
    %1783 = vmatprep.subr.bf16.mxu0 %v1551
    %1784 = vmatpush1.bf16.msra.mxu0 %v1550
    %1785 = vmatprep.subr.bf16.mxu0 %v1553
    %1786 = vmatpush1.bf16.msra.mxu0 %v1552
    %1787 = vmatprep.subr.bf16.mxu0 %v1555
    %1788 = vmatpush1.bf16.msra.mxu0 %v1554
    %1789 = vmatprep.subr.bf16.mxu0 %v1557
    %1790 = vmatpush1.bf16.msra.mxu0 %v1556
    %1791 = vmatprep.subr.bf16.mxu0 %v1559
    %1792 = vmatpush1.bf16.msra.mxu0 %v1558
    %1793 = vmatprep.subr.bf16.mxu0 %v1561
    %1794 = vmatpush1.bf16.msra.mxu0 %v1560
    %1795 = vmatprep.subr.bf16.mxu0 %v1563
    %1796 = vmatpush1.bf16.msra.mxu0 %v1562
    %1797 = vmatprep.mubr.bf16.mxu0 %v317
    %1798 = vmatmul.mubr.bf16.gmra.mrb[0].mxu0 %v316
    %v1799 = vpop.f32.mrb[0].mxu0
    %v1800 = vadd.f32 %v1759, %v1799
    %v1801 = vpop.f32.mrb[0].mxu0
    %v1802 = vadd.f32 %v1761, %v1801
    %v1803 = vpop.f32.mrb[0].mxu0
    %v1804 = vpop.f32.mrb[0].mxu0
    %1805 = vdwg.mxu0
    %1806 = vmatprep.subr.bf16.mxu0 %v1565
    %1807 = vmatpush1.bf16.msra.mxu0 %v1564
    %1808 = vmatprep.subr.bf16.mxu0 %v1567
    %1809 = vmatpush1.bf16.msra.mxu0 %v1566
    %1810 = vmatprep.subr.bf16.mxu0 %v1569
    %1811 = vmatpush1.bf16.msra.mxu0 %v1568
    %1812 = vmatprep.subr.bf16.mxu0 %v1571
    %1813 = vmatpush1.bf16.msra.mxu0 %v1570
    %1814 = vmatprep.subr.bf16.mxu0 %v1573
    %1815 = vmatpush1.bf16.msra.mxu0 %v1572
    %1816 = vmatprep.subr.bf16.mxu0 %v1575
    %1817 = vmatpush1.bf16.msra.mxu0 %v1574
    %1818 = vmatprep.subr.bf16.mxu0 %v1577
    %1819 = vmatpush1.bf16.msra.mxu0 %v1576
    %1820 = vmatprep.subr.bf16.mxu0 %v1579
    %1821 = vmatpush1.bf16.msra.mxu0 %v1578
    %1822 = vmatprep.subr.bf16.mxu0 %v1581
    %1823 = vmatpush1.bf16.msra.mxu0 %v1580
    %1824 = vmatprep.subr.bf16.mxu0 %v1583
    %1825 = vmatpush1.bf16.msra.mxu0 %v1582
    %1826 = vmatprep.subr.bf16.mxu0 %v1585
    %1827 = vmatpush1.bf16.msra.mxu0 %v1584
    %1828 = vmatprep.subr.bf16.mxu0 %v1587
    %1829 = vmatpush1.bf16.msra.mxu0 %v1586
    %1830 = vmatprep.subr.bf16.mxu0 %v1589
    %1831 = vmatpush1.bf16.msra.mxu0 %v1588
    %1832 = vmatprep.subr.bf16.mxu0 %v1591
    %1833 = vmatpush1.bf16.msra.mxu0 %v1590
    %1834 = vmatprep.subr.bf16.mxu0 %v1593
    %1835 = vmatpush1.bf16.msra.mxu0 %v1592
    %1836 = vmatprep.subr.bf16.mxu0 %v1595
    %1837 = vmatpush1.bf16.msra.mxu0 %v1594
    %1838 = vmatprep.mubr.bf16.mxu0 %v319
    %1839 = vmatmul.mubr.bf16.gmra.mrb[0].mxu0 %v318
    %v1840 = vpop.f32.mrb[0].mxu0
    %v1841 = vadd.f32 %v1800, %v1840
    %v1842 = vpop.f32.mrb[0].mxu0
    %v1843 = vadd.f32 %v1802, %v1842
    %v1844 = vpop.f32.mrb[0].mxu0
    %v1845 = vpop.f32.mrb[0].mxu0
    %1846 = vdwg.mxu0
    %1847 = vmatprep.subr.bf16.mxu0 %v1597
    %1848 = vmatpush1.bf16.msra.mxu0 %v1596
    %1849 = vmatprep.subr.bf16.mxu0 %v1599
    %1850 = vmatpush1.bf16.msra.mxu0 %v1598
    %1851 = vmatprep.subr.bf16.mxu0 %v1601
    %1852 = vmatpush1.bf16.msra.mxu0 %v1600
    %1853 = vmatprep.subr.bf16.mxu0 %v1603
    %1854 = vmatpush1.bf16.msra.mxu0 %v1602
    %1855 = vmatprep.subr.bf16.mxu0 %v1605
    %1856 = vmatpush1.bf16.msra.mxu0 %v1604
    %1857 = vmatprep.subr.bf16.mxu0 %v1607
    %1858 = vmatpush1.bf16.msra.mxu0 %v1606
    %1859 = vmatprep.subr.bf16.mxu0 %v1609
    %1860 = vmatpush1.bf16.msra.mxu0 %v1608
    %1861 = vmatprep.subr.bf16.mxu0 %v1611
    %1862 = vmatpush1.bf16.msra.mxu0 %v1610
    %1863 = vmatprep.subr.bf16.mxu0 0
    %1864 = vmatpush1.bf16.msra.mxu0 0
    %1865 = vmatprep.subr.bf16.mxu0 0
    %1866 = vmatpush1.bf16.msra.mxu0 0
    %1867 = vmatprep.subr.bf16.mxu0 0
    %1868 = vmatpush1.bf16.msra.mxu0 0
    %1869 = vmatprep.subr.bf16.mxu0 0
    %1870 = vmatpush1.bf16.msra.mxu0 0
    %1871 = vmatprep.subr.bf16.mxu0 0
    %1872 = vmatpush1.bf16.msra.mxu0 0
    %1873 = vmatprep.subr.bf16.mxu0 0
    %1874 = vmatpush1.bf16.msra.mxu0 0
    %1875 = vmatprep.subr.bf16.mxu0 0
    %1876 = vmatpush1.bf16.msra.mxu0 0
    %1877 = vmatprep.subr.bf16.mxu0 0
    %1878 = vmatpush1.bf16.msra.mxu0 0
    %1879 = vmatprep.mubr.bf16.mxu0 0
    %1880 = vmatmul.mubr.bf16.gmra.mrb[0].mxu0 %v320
    %v1881 = vpop.f32.mrb[0].mxu0
    %v1882 = vadd.f32 %v1841, %v1881
    %v1883 = vpop.f32.mrb[0].mxu0
    %v1884 = vadd.f32 %v1843, %v1883
    %v1885 = vpop.f32.mrb[0].mxu0
    %v1886 = vpop.f32.mrb[0].mxu0
    %1887 = vdwg.mxu0
    %v1888 = vadd.f32 %v1046, %v1882
    %v1889 = vadd.f32 %v1048, %v1884
    %v1890 = vmul.f32 %v1046, %v1882
    %v1891 = vmul.f32 %v1048, %v1884
    %v1892 = vsub.f32 %v1888, %v1890
    %v1893 = vsub.f32 %v1889, %v1891
    %v1894 = vsub.f32 1.0, %v1892
    %v1895 = vsub.f32 1.0, %v1893
    %v1896 = vpack.c.bf16 %v1894, %v1894
    %v1897 = vpack.c.bf16 %v1895, %v1895
    %v1898 = vld [vmem:[#allocation8] sm:$0xff]
    %v1899 = vld [vmem:[#allocation8 + $0x8] sm:$0xff]
    %v1900 = vld [vmem:[#allocation8 + $0x10] sm:$0xff]
    %v1901 = vld [vmem:[#allocation8 + $0x18] sm:$0xff]
    %v1902 = vld [vmem:[#allocation8 + $0x20] sm:$0xff]
    %v1903 = vld [vmem:[#allocation8 + $0x28] sm:$0xff]
    %v1904 = vld [vmem:[#allocation8 + $0x30] sm:$0xff]
    %v1905 = vld [vmem:[#allocation8 + $0x38] sm:$0xff]
    %v1906 = vld [vmem:[#allocation8 + $0x40] sm:$0xff]
    %v1907 = vld [vmem:[#allocation8 + $0x48] sm:$0xff]
    %v1908 = vld [vmem:[#allocation8 + $0x50] sm:$0xff]
    %v1909 = vld [vmem:[#allocation8 + $0x58] sm:$0xff]
    %v1910 = vld [vmem:[#allocation8 + $0x60] sm:$0xff]
    %v1911 = vld [vmem:[#allocation8 + $0x68] sm:$0xff]
    %v1912 = vld [vmem:[#allocation8 + $0x70] sm:$0xff]
    %v1913 = vld [vmem:[#allocation8 + $0x78] sm:$0xff]
    %v1914 = vld [vmem:[#allocation8 + $0x80] sm:$0xff]
    %v1915 = vld [vmem:[#allocation8 + $0x88] sm:$0xff]
    %v1916 = vld [vmem:[#allocation8 + $0x90] sm:$0xff]
    %v1917 = vld [vmem:[#allocation8 + $0x98] sm:$0xff]
    %v1918 = vld [vmem:[#allocation8 + $0xa0] sm:$0xff]
    %v1919 = vld [vmem:[#allocation8 + $0xa8] sm:$0xff]
    %v1920 = vld [vmem:[#allocation8 + $0xb0] sm:$0xff]
    %v1921 = vld [vmem:[#allocation8 + $0xb8] sm:$0xff]
    %v1922 = vld [vmem:[#allocation8 + $0xc0] sm:$0xff]
    %v1923 = vld [vmem:[#allocation8 + $0xc8] sm:$0xff]
    %v1924 = vld [vmem:[#allocation8 + $0xd0] sm:$0xff]
    %v1925 = vld [vmem:[#allocation8 + $0xd8] sm:$0xff]
    %v1926 = vld [vmem:[#allocation8 + $0xe0] sm:$0xff]
    %v1927 = vld [vmem:[#allocation8 + $0xe8] sm:$0xff]
    %v1928 = vld [vmem:[#allocation8 + $0xf0] sm:$0xff]
    %v1929 = vld [vmem:[#allocation8 + $0xf8] sm:$0xff]
    %v1962 = vunpack.c.l.b16 %v1898
    %v1963 = vunpack.c.h.b16 %v1898
    %v1964 = vunpack.c.l.b16 %v1899
    %v1965 = vunpack.c.h.b16 %v1899
    %v1966 = vunpack.c.l.b16 %v1900
    %v1967 = vunpack.c.h.b16 %v1900
    %v1968 = vunpack.c.l.b16 %v1901
    %v1969 = vunpack.c.h.b16 %v1901
    %v1970 = vunpack.c.l.b16 %v1902
    %v1971 = vunpack.c.h.b16 %v1902
    %v1972 = vunpack.c.l.b16 %v1903
    %v1973 = vunpack.c.h.b16 %v1903
    %v1974 = vunpack.c.l.b16 %v1904
    %v1975 = vunpack.c.h.b16 %v1904
    %v1976 = vunpack.c.l.b16 %v1905
    %v1977 = vunpack.c.h.b16 %v1905
    %v1978 = vunpack.c.l.b16 %v1906
    %v1979 = vunpack.c.h.b16 %v1906
    %v1980 = vunpack.c.l.b16 %v1907
    %v1981 = vunpack.c.h.b16 %v1907
    %v1982 = vunpack.c.l.b16 %v1908
    %v1983 = vunpack.c.h.b16 %v1908
    %v1984 = vunpack.c.l.b16 %v1909
    %v1985 = vunpack.c.h.b16 %v1909
    %v1986 = vunpack.c.l.b16 %v1910
    %v1987 = vunpack.c.h.b16 %v1910
    %v1988 = vunpack.c.l.b16 %v1911
    %v1989 = vunpack.c.h.b16 %v1911
    %v1990 = vunpack.c.l.b16 %v1912
    %v1991 = vunpack.c.h.b16 %v1912
    %v1992 = vunpack.c.l.b16 %v1913
    %v1993 = vunpack.c.h.b16 %v1913
    %v1994 = vunpack.c.l.b16 %v1914
    %v1995 = vunpack.c.h.b16 %v1914
    %v1996 = vunpack.c.l.b16 %v1915
    %v1997 = vunpack.c.h.b16 %v1915
    %v1998 = vunpack.c.l.b16 %v1916
    %v1999 = vunpack.c.h.b16 %v1916
    %v2000 = vunpack.c.l.b16 %v1917
    %v2001 = vunpack.c.h.b16 %v1917
    %v2002 = vunpack.c.l.b16 %v1918
    %v2003 = vunpack.c.h.b16 %v1918
    %v2004 = vunpack.c.l.b16 %v1919
    %v2005 = vunpack.c.h.b16 %v1919
    %v2006 = vunpack.c.l.b16 %v1920
    %v2007 = vunpack.c.h.b16 %v1920
    %v2008 = vunpack.c.l.b16 %v1921
    %v2009 = vunpack.c.h.b16 %v1921
    %v2010 = vunpack.c.l.b16 %v1922
    %v2011 = vunpack.c.h.b16 %v1922
    %v2012 = vunpack.c.l.b16 %v1923
    %v2013 = vunpack.c.h.b16 %v1923
    %v2014 = vunpack.c.l.b16 %v1924
    %v2015 = vunpack.c.h.b16 %v1924
    %v2016 = vunpack.c.l.b16 %v1925
    %v2017 = vunpack.c.h.b16 %v1925
    %v2018 = vunpack.c.l.b16 %v1926
    %v2019 = vunpack.c.h.b16 %v1926
    %v2020 = vunpack.c.l.b16 %v1927
    %v2021 = vunpack.c.h.b16 %v1927
    %v2022 = vunpack.c.l.b16 %v1928
    %v2023 = vunpack.c.h.b16 %v1928
    %v2024 = vunpack.c.l.b16 %v1929
    %v2025 = vunpack.c.h.b16 %v1929
    %v2026 = vpack.c.b16 %v1964, %v1962
    %v2027 = vpack.c.b16 %v1965, %v1963
    %v2028 = vpack.c.b16 %v1968, %v1966
    %v2029 = vpack.c.b16 %v1969, %v1967
    %v2030 = vpack.c.b16 %v1972, %v1970
    %v2031 = vpack.c.b16 %v1973, %v1971
    %v2032 = vpack.c.b16 %v1976, %v1974
    %v2033 = vpack.c.b16 %v1977, %v1975
    %v2034 = vpack.c.b16 %v1980, %v1978
    %v2035 = vpack.c.b16 %v1981, %v1979
    %v2036 = vpack.c.b16 %v1984, %v1982
    %v2037 = vpack.c.b16 %v1985, %v1983
    %v2038 = vpack.c.b16 %v1988, %v1986
    %v2039 = vpack.c.b16 %v1989, %v1987
    %v2040 = vpack.c.b16 %v1992, %v1990
    %v2041 = vpack.c.b16 %v1993, %v1991
    %v2042 = vpack.c.b16 %v1996, %v1994
    %v2043 = vpack.c.b16 %v1997, %v1995
    %v2044 = vpack.c.b16 %v2000, %v1998
    %v2045 = vpack.c.b16 %v2001, %v1999
    %v2046 = vpack.c.b16 %v2004, %v2002
    %v2047 = vpack.c.b16 %v2005, %v2003
    %v2048 = vpack.c.b16 %v2008, %v2006
    %v2049 = vpack.c.b16 %v2009, %v2007
    %v2050 = vpack.c.b16 %v2012, %v2010
    %v2051 = vpack.c.b16 %v2013, %v2011
    %v2052 = vpack.c.b16 %v2016, %v2014
    %v2053 = vpack.c.b16 %v2017, %v2015
    %v2054 = vpack.c.b16 %v2020, %v2018
    %v2055 = vpack.c.b16 %v2021, %v2019
    %v2056 = vpack.c.b16 %v2024, %v2022
    %v2057 = vpack.c.b16 %v2025, %v2023
    %2090 = vmatprep.subr.bf16.mxu0 %v2027
    %2091 = vmatpush1.bf16.msra.mxu0 %v2026
    %2092 = vmatprep.subr.bf16.mxu0 %v2029
    %2093 = vmatpush1.bf16.msra.mxu0 %v2028
    %2094 = vmatprep.subr.bf16.mxu0 %v2031
    %2095 = vmatpush1.bf16.msra.mxu0 %v2030
    %2096 = vmatprep.subr.bf16.mxu0 %v2033
    %2097 = vmatpush1.bf16.msra.mxu0 %v2032
    %2098 = vmatprep.subr.bf16.mxu0 %v2035
    %2099 = vmatpush1.bf16.msra.mxu0 %v2034
    %2100 = vmatprep.subr.bf16.mxu0 %v2037
    %2101 = vmatpush1.bf16.msra.mxu0 %v2036
    %2102 = vmatprep.subr.bf16.mxu0 %v2039
    %2103 = vmatpush1.bf16.msra.mxu0 %v2038
    %2104 = vmatprep.subr.bf16.mxu0 %v2041
    %2105 = vmatpush1.bf16.msra.mxu0 %v2040
    %2106 = vmatprep.subr.bf16.mxu0 %v2043
    %2107 = vmatpush1.bf16.msra.mxu0 %v2042
    %2108 = vmatprep.subr.bf16.mxu0 %v2045
    %2109 = vmatpush1.bf16.msra.mxu0 %v2044
    %2110 = vmatprep.subr.bf16.mxu0 %v2047
    %2111 = vmatpush1.bf16.msra.mxu0 %v2046
    %2112 = vmatprep.subr.bf16.mxu0 %v2049
    %2113 = vmatpush1.bf16.msra.mxu0 %v2048
    %2114 = vmatprep.subr.bf16.mxu0 %v2051
    %2115 = vmatpush1.bf16.msra.mxu0 %v2050
    %2116 = vmatprep.subr.bf16.mxu0 %v2053
    %2117 = vmatpush1.bf16.msra.mxu0 %v2052
    %2118 = vmatprep.subr.bf16.mxu0 %v2055
    %2119 = vmatpush1.bf16.msra.mxu0 %v2054
    %2120 = vmatprep.subr.bf16.mxu0 %v2057
    %2121 = vmatpush1.bf16.msra.mxu0 %v2056
    %2122 = vmatprep.mubr.bf16.mxu0 %v1897
    %2123 = vmatmul.mubr.bf16.gmra.mrb[0].mxu0 %v1896
    %v2124 = vpop.f32.mrb[0].mxu0
    %v2125 = vadd.f32 0.0, %v2124
    %v2126 = vpop.f32.mrb[0].mxu0
    %v2127 = vadd.f32 0.0, %v2126
    %v2128 = vpop.f32.mrb[0].mxu0
    %v2129 = vpop.f32.mrb[0].mxu0
    %2130 = vdwg.mxu0
    %v2131 = vld [vmem:[#allocation10] sm:$0xff]
    %v2132 = vld [vmem:[#allocation10 + $0x8] sm:$0xff]
    %v2133 = vld [vmem:[#allocation10 + $0x10] sm:$0xff]
    %v2134 = vld [vmem:[#allocation10 + $0x18] sm:$0xff]
    %v2135 = vld [vmem:[#allocation10 + $0x20] sm:$0xff]
    %v2136 = vld [vmem:[#allocation10 + $0x28] sm:$0xff]
    %v2137 = vld [vmem:[#allocation10 + $0x30] sm:$0xff]
    %v2138 = vld [vmem:[#allocation10 + $0x38] sm:$0xff]
    %v2139 = vld [vmem:[#allocation10 + $0x40] sm:$0xff]
    %v2140 = vld [vmem:[#allocation10 + $0x48] sm:$0xff]
    %v2141 = vld [vmem:[#allocation10 + $0x50] sm:$0xff]
    %v2142 = vld [vmem:[#allocation10 + $0x58] sm:$0xff]
    %v2143 = vld [vmem:[#allocation10 + $0x60] sm:$0xff]
    %v2144 = vld [vmem:[#allocation10 + $0x68] sm:$0xff]
    %v2145 = vld [vmem:[#allocation10 + $0x70] sm:$0xff]
    %v2146 = vld [vmem:[#allocation10 + $0x78] sm:$0xff]
    %v2147 = vld [vmem:[#allocation10 + $0x80] sm:$0xff]
    %v2148 = vld [vmem:[#allocation10 + $0x88] sm:$0xff]
    %v2149 = vld [vmem:[#allocation10 + $0x90] sm:$0xff]
    %v2150 = vld [vmem:[#allocation10 + $0x98] sm:$0xff]
    %v2151 = vld [vmem:[#allocation10 + $0xa0] sm:$0xff]
    %v2152 = vld [vmem:[#allocation10 + $0xa8] sm:$0xff]
    %v2153 = vld [vmem:[#allocation10 + $0xb0] sm:$0xff]
    %v2154 = vld [vmem:[#allocation10 + $0xb8] sm:$0xff]
    %v2155 = vld [vmem:[#allocation10 + $0xc0] sm:$0xff]
    %v2156 = vld [vmem:[#allocation10 + $0xc8] sm:$0xff]
    %v2157 = vld [vmem:[#allocation10 + $0xd0] sm:$0xff]
    %v2158 = vld [vmem:[#allocation10 + $0xd8] sm:$0xff]
    %v2159 = vld [vmem:[#allocation10 + $0xe0] sm:$0xff]
    %v2160 = vld [vmem:[#allocation10 + $0xe8] sm:$0xff]
    %v2161 = vld [vmem:[#allocation10 + $0xf0] sm:$0xff]
    %v2162 = vld [vmem:[#allocation10 + $0xf8] sm:$0xff]
    %v2195 = vunpack.c.l.b16 %v2131
    %v2196 = vunpack.c.h.b16 %v2131
    %v2197 = vunpack.c.l.b16 %v2132
    %v2198 = vunpack.c.h.b16 %v2132
    %v2199 = vunpack.c.l.b16 %v2133
    %v2200 = vunpack.c.h.b16 %v2133
    %v2201 = vunpack.c.l.b16 %v2134
    %v2202 = vunpack.c.h.b16 %v2134
    %v2203 = vunpack.c.l.b16 %v2135
    %v2204 = vunpack.c.h.b16 %v2135
    %v2205 = vunpack.c.l.b16 %v2136
    %v2206 = vunpack.c.h.b16 %v2136
    %v2207 = vunpack.c.l.b16 %v2137
    %v2208 = vunpack.c.h.b16 %v2137
    %v2209 = vunpack.c.l.b16 %v2138
    %v2210 = vunpack.c.h.b16 %v2138
    %v2211 = vunpack.c.l.b16 %v2139
    %v2212 = vunpack.c.h.b16 %v2139
    %v2213 = vunpack.c.l.b16 %v2140
    %v2214 = vunpack.c.h.b16 %v2140
    %v2215 = vunpack.c.l.b16 %v2141
    %v2216 = vunpack.c.h.b16 %v2141
    %v2217 = vunpack.c.l.b16 %v2142
    %v2218 = vunpack.c.h.b16 %v2142
    %v2219 = vunpack.c.l.b16 %v2143
    %v2220 = vunpack.c.h.b16 %v2143
    %v2221 = vunpack.c.l.b16 %v2144
    %v2222 = vunpack.c.h.b16 %v2144
    %v2223 = vunpack.c.l.b16 %v2145
    %v2224 = vunpack.c.h.b16 %v2145
    %v2225 = vunpack.c.l.b16 %v2146
    %v2226 = vunpack.c.h.b16 %v2146
    %v2227 = vunpack.c.l.b16 %v2147
    %v2228 = vunpack.c.h.b16 %v2147
    %v2229 = vunpack.c.l.b16 %v2148
    %v2230 = vunpack.c.h.b16 %v2148
    %v2231 = vunpack.c.l.b16 %v2149
    %v2232 = vunpack.c.h.b16 %v2149
    %v2233 = vunpack.c.l.b16 %v2150
    %v2234 = vunpack.c.h.b16 %v2150
    %v2235 = vunpack.c.l.b16 %v2151
    %v2236 = vunpack.c.h.b16 %v2151
    %v2237 = vunpack.c.l.b16 %v2152
    %v2238 = vunpack.c.h.b16 %v2152
    %v2239 = vunpack.c.l.b16 %v2153
    %v2240 = vunpack.c.h.b16 %v2153
    %v2241 = vunpack.c.l.b16 %v2154
    %v2242 = vunpack.c.h.b16 %v2154
    %v2243 = vunpack.c.l.b16 %v2155
    %v2244 = vunpack.c.h.b16 %v2155
    %v2245 = vunpack.c.l.b16 %v2156
    %v2246 = vunpack.c.h.b16 %v2156
    %v2247 = vunpack.c.l.b16 %v2157
    %v2248 = vunpack.c.h.b16 %v2157
    %v2249 = vunpack.c.l.b16 %v2158
    %v2250 = vunpack.c.h.b16 %v2158
    %v2251 = vunpack.c.l.b16 %v2159
    %v2252 = vunpack.c.h.b16 %v2159
    %v2253 = vunpack.c.l.b16 %v2160
    %v2254 = vunpack.c.h.b16 %v2160
    %v2255 = vunpack.c.l.b16 %v2161
    %v2256 = vunpack.c.h.b16 %v2161
    %v2257 = vunpack.c.l.b16 %v2162
    %v2258 = vunpack.c.h.b16 %v2162
    %v2259 = vpack.c.b16 %v2197, %v2195
    %v2260 = vpack.c.b16 %v2198, %v2196
    %v2261 = vpack.c.b16 %v2201, %v2199
    %v2262 = vpack.c.b16 %v2202, %v2200
    %v2263 = vpack.c.b16 %v2205, %v2203
    %v2264 = vpack.c.b16 %v2206, %v2204
    %v2265 = vpack.c.b16 %v2209, %v2207
    %v2266 = vpack.c.b16 %v2210, %v2208
    %v2267 = vpack.c.b16 %v2213, %v2211
    %v2268 = vpack.c.b16 %v2214, %v2212
    %v2269 = vpack.c.b16 %v2217, %v2215
    %v2270 = vpack.c.b16 %v2218, %v2216
    %v2271 = vpack.c.b16 %v2221, %v2219
    %v2272 = vpack.c.b16 %v2222, %v2220
    %v2273 = vpack.c.b16 %v2225, %v2223
    %v2274 = vpack.c.b16 %v2226, %v2224
    %v2275 = vpack.c.b16 %v2229, %v2227
    %v2276 = vpack.c.b16 %v2230, %v2228
    %v2277 = vpack.c.b16 %v2233, %v2231
    %v2278 = vpack.c.b16 %v2234, %v2232
    %v2279 = vpack.c.b16 %v2237, %v2235
    %v2280 = vpack.c.b16 %v2238, %v2236
    %v2281 = vpack.c.b16 %v2241, %v2239
    %v2282 = vpack.c.b16 %v2242, %v2240
    %v2283 = vpack.c.b16 %v2245, %v2243
    %v2284 = vpack.c.b16 %v2246, %v2244
    %v2285 = vpack.c.b16 %v2249, %v2247
    %v2286 = vpack.c.b16 %v2250, %v2248
    %v2287 = vpack.c.b16 %v2253, %v2251
    %v2288 = vpack.c.b16 %v2254, %v2252
    %v2289 = vpack.c.b16 %v2257, %v2255
    %v2290 = vpack.c.b16 %v2258, %v2256
    %2323 = vmatprep.subr.bf16.mxu0 %v2260
    %2324 = vmatpush1.bf16.msra.mxu0 %v2259
    %2325 = vmatprep.subr.bf16.mxu0 %v2262
    %2326 = vmatpush1.bf16.msra.mxu0 %v2261
    %2327 = vmatprep.subr.bf16.mxu0 %v2264
    %2328 = vmatpush1.bf16.msra.mxu0 %v2263
    %2329 = vmatprep.subr.bf16.mxu0 %v2266
    %2330 = vmatpush1.bf16.msra.mxu0 %v2265
    %2331 = vmatprep.subr.bf16.mxu0 %v2268
    %2332 = vmatpush1.bf16.msra.mxu0 %v2267
    %2333 = vmatprep.subr.bf16.mxu0 %v2270
    %2334 = vmatpush1.bf16.msra.mxu0 %v2269
    %2335 = vmatprep.subr.bf16.mxu0 %v2272
    %2336 = vmatpush1.bf16.msra.mxu0 %v2271
    %2337 = vmatprep.subr.bf16.mxu0 %v2274
    %2338 = vmatpush1.bf16.msra.mxu0 %v2273
    %2339 = vmatprep.subr.bf16.mxu0 %v2276
    %2340 = vmatpush1.bf16.msra.mxu0 %v2275
    %2341 = vmatprep.subr.bf16.mxu0 %v2278
    %2342 = vmatpush1.bf16.msra.mxu0 %v2277
    %2343 = vmatprep.subr.bf16.mxu0 %v2280
    %2344 = vmatpush1.bf16.msra.mxu0 %v2279
    %2345 = vmatprep.subr.bf16.mxu0 %v2282
    %2346 = vmatpush1.bf16.msra.mxu0 %v2281
    %2347 = vmatprep.subr.bf16.mxu0 %v2284
    %2348 = vmatpush1.bf16.msra.mxu0 %v2283
    %2349 = vmatprep.subr.bf16.mxu0 %v2286
    %2350 = vmatpush1.bf16.msra.mxu0 %v2285
    %2351 = vmatprep.subr.bf16.mxu0 %v2288
    %2352 = vmatpush1.bf16.msra.mxu0 %v2287
    %2353 = vmatprep.subr.bf16.mxu0 %v2290
    %2354 = vmatpush1.bf16.msra.mxu0 %v2289
    %2355 = vmatprep.mubr.bf16.mxu0 %v1897
    %2356 = vmatmul.mubr.bf16.gmra.mrb[0].mxu0 %v1896
    %v2357 = vpop.f32.mrb[0].mxu0
    %v2358 = vadd.f32 0.0, %v2357
    %v2359 = vpop.f32.mrb[0].mxu0
    %v2360 = vadd.f32 0.0, %v2359
    %v2361 = vpop.f32.mrb[0].mxu0
    %v2362 = vpop.f32.mrb[0].mxu0
    %2363 = vdwg.mxu0
    %v2364 = vadd.f32 %v2125, %v2358
    %v2365 = vadd.f32 %v2127, %v2360
    %v2366 = vmul.f32 %v2125, %v2358
    %v2367 = vmul.f32 %v2127, %v2360
    %v2368 = vsub.f32 %v2364, %v2366
    %v2369 = vsub.f32 %v2365, %v2367
    %v2370 = vsub.f32 1.0, %v2368
    %v2371 = vsub.f32 1.0, %v2369
    %v2372 = vpack.c.bf16 %v2370, %v2370
    %v2373 = vpack.c.bf16 %v2371, %v2371
    %v2374 = vld [vmem:[#allocation11] sm:$0xff]
    %v2375 = vld [vmem:[#allocation11 + $0x8] sm:$0xff]
    %v2376 = vld [vmem:[#allocation11 + $0x10] sm:$0xff]
    %v2377 = vld [vmem:[#allocation11 + $0x18] sm:$0xff]
    %v2378 = vld [vmem:[#allocation11 + $0x20] sm:$0xff]
    %v2379 = vld [vmem:[#allocation11 + $0x28] sm:$0xff]
    %v2380 = vld [vmem:[#allocation11 + $0x30] sm:$0xff]
    %v2381 = vld [vmem:[#allocation11 + $0x38] sm:$0xff]
    %v2382 = vld [vmem:[#allocation11 + $0x40] sm:$0xff]
    %v2383 = vld [vmem:[#allocation11 + $0x48] sm:$0xff]
    %v2384 = vld [vmem:[#allocation11 + $0x50] sm:$0xff]
    %v2385 = vld [vmem:[#allocation11 + $0x58] sm:$0xff]
    %v2386 = vld [vmem:[#allocation11 + $0x60] sm:$0xff]
    %v2387 = vld [vmem:[#allocation11 + $0x68] sm:$0xff]
    %v2388 = vld [vmem:[#allocation11 + $0x70] sm:$0xff]
    %v2389 = vld [vmem:[#allocation11 + $0x78] sm:$0xff]
    %v2390 = vld [vmem:[#allocation11 + $0x80] sm:$0xff]
    %v2391 = vld [vmem:[#allocation11 + $0x88] sm:$0xff]
    %v2392 = vld [vmem:[#allocation11 + $0x90] sm:$0xff]
    %v2393 = vld [vmem:[#allocation11 + $0x98] sm:$0xff]
    %v2394 = vld [vmem:[#allocation11 + $0xa0] sm:$0xff]
    %v2395 = vld [vmem:[#allocation11 + $0xa8] sm:$0xff]
    %v2396 = vld [vmem:[#allocation11 + $0xb0] sm:$0xff]
    %v2397 = vld [vmem:[#allocation11 + $0xb8] sm:$0xff]
    %v2398 = vld [vmem:[#allocation11 + $0xc0] sm:$0xff]
    %v2399 = vld [vmem:[#allocation11 + $0xc8] sm:$0xff]
    %v2400 = vld [vmem:[#allocation11 + $0xd0] sm:$0xff]
    %v2401 = vld [vmem:[#allocation11 + $0xd8] sm:$0xff]
    %v2402 = vld [vmem:[#allocation11 + $0xe0] sm:$0xff]
    %v2403 = vld [vmem:[#allocation11 + $0xe8] sm:$0xff]
    %v2404 = vld [vmem:[#allocation11 + $0xf0] sm:$0xff]
    %v2405 = vld [vmem:[#allocation11 + $0xf8] sm:$0xff]
    %v2438 = vunpack.c.l.b16 %v2374
    %v2439 = vunpack.c.h.b16 %v2374
    %v2440 = vunpack.c.l.b16 %v2375
    %v2441 = vunpack.c.h.b16 %v2375
    %v2442 = vunpack.c.l.b16 %v2376
    %v2443 = vunpack.c.h.b16 %v2376
    %v2444 = vunpack.c.l.b16 %v2377
    %v2445 = vunpack.c.h.b16 %v2377
    %v2446 = vunpack.c.l.b16 %v2378
    %v2447 = vunpack.c.h.b16 %v2378
    %v2448 = vunpack.c.l.b16 %v2379
    %v2449 = vunpack.c.h.b16 %v2379
    %v2450 = vunpack.c.l.b16 %v2380
    %v2451 = vunpack.c.h.b16 %v2380
    %v2452 = vunpack.c.l.b16 %v2381
    %v2453 = vunpack.c.h.b16 %v2381
    %v2454 = vunpack.c.l.b16 %v2382
    %v2455 = vunpack.c.h.b16 %v2382
    %v2456 = vunpack.c.l.b16 %v2383
    %v2457 = vunpack.c.h.b16 %v2383
    %v2458 = vunpack.c.l.b16 %v2384
    %v2459 = vunpack.c.h.b16 %v2384
    %v2460 = vunpack.c.l.b16 %v2385
    %v2461 = vunpack.c.h.b16 %v2385
    %v2462 = vunpack.c.l.b16 %v2386
    %v2463 = vunpack.c.h.b16 %v2386
    %v2464 = vunpack.c.l.b16 %v2387
    %v2465 = vunpack.c.h.b16 %v2387
    %v2466 = vunpack.c.l.b16 %v2388
    %v2467 = vunpack.c.h.b16 %v2388
    %v2468 = vunpack.c.l.b16 %v2389
    %v2469 = vunpack.c.h.b16 %v2389
    %v2470 = vunpack.c.l.b16 %v2390
    %v2471 = vunpack.c.h.b16 %v2390
    %v2472 = vunpack.c.l.b16 %v2391
    %v2473 = vunpack.c.h.b16 %v2391
    %v2474 = vunpack.c.l.b16 %v2392
    %v2475 = vunpack.c.h.b16 %v2392
    %v2476 = vunpack.c.l.b16 %v2393
    %v2477 = vunpack.c.h.b16 %v2393
    %v2478 = vunpack.c.l.b16 %v2394
    %v2479 = vunpack.c.h.b16 %v2394
    %v2480 = vunpack.c.l.b16 %v2395
    %v2481 = vunpack.c.h.b16 %v2395
    %v2482 = vunpack.c.l.b16 %v2396
    %v2483 = vunpack.c.h.b16 %v2396
    %v2484 = vunpack.c.l.b16 %v2397
    %v2485 = vunpack.c.h.b16 %v2397
    %v2486 = vunpack.c.l.b16 %v2398
    %v2487 = vunpack.c.h.b16 %v2398
    %v2488 = vunpack.c.l.b16 %v2399
    %v2489 = vunpack.c.h.b16 %v2399
    %v2490 = vunpack.c.l.b16 %v2400
    %v2491 = vunpack.c.h.b16 %v2400
    %v2492 = vunpack.c.l.b16 %v2401
    %v2493 = vunpack.c.h.b16 %v2401
    %v2494 = vunpack.c.l.b16 %v2402
    %v2495 = vunpack.c.h.b16 %v2402
    %v2496 = vunpack.c.l.b16 %v2403
    %v2497 = vunpack.c.h.b16 %v2403
    %v2498 = vunpack.c.l.b16 %v2404
    %v2499 = vunpack.c.h.b16 %v2404
    %v2500 = vunpack.c.l.b16 %v2405
    %v2501 = vunpack.c.h.b16 %v2405
    %v2502 = vpack.c.b16 %v2440, %v2438
    %v2503 = vpack.c.b16 %v2441, %v2439
    %v2504 = vpack.c.b16 %v2444, %v2442
    %v2505 = vpack.c.b16 %v2445, %v2443
    %v2506 = vpack.c.b16 %v2448, %v2446
    %v2507 = vpack.c.b16 %v2449, %v2447
    %v2508 = vpack.c.b16 %v2452, %v2450
    %v2509 = vpack.c.b16 %v2453, %v2451
    %v2510 = vpack.c.b16 %v2456, %v2454
    %v2511 = vpack.c.b16 %v2457, %v2455
    %v2512 = vpack.c.b16 %v2460, %v2458
    %v2513 = vpack.c.b16 %v2461, %v2459
    %v2514 = vpack.c.b16 %v2464, %v2462
    %v2515 = vpack.c.b16 %v2465, %v2463
    %v2516 = vpack.c.b16 %v2468, %v2466
    %v2517 = vpack.c.b16 %v2469, %v2467
    %v2518 = vpack.c.b16 %v2472, %v2470
    %v2519 = vpack.c.b16 %v2473, %v2471
    %v2520 = vpack.c.b16 %v2476, %v2474
    %v2521 = vpack.c.b16 %v2477, %v2475
    %v2522 = vpack.c.b16 %v2480, %v2478
    %v2523 = vpack.c.b16 %v2481, %v2479
    %v2524 = vpack.c.b16 %v2484, %v2482
    %v2525 = vpack.c.b16 %v2485, %v2483
    %v2526 = vpack.c.b16 %v2488, %v2486
    %v2527 = vpack.c.b16 %v2489, %v2487
    %v2528 = vpack.c.b16 %v2492, %v2490
    %v2529 = vpack.c.b16 %v2493, %v2491
    %v2530 = vpack.c.b16 %v2496, %v2494
    %v2531 = vpack.c.b16 %v2497, %v2495
    %v2532 = vpack.c.b16 %v2500, %v2498
    %v2533 = vpack.c.b16 %v2501, %v2499
    %2566 = vmatprep.subr.bf16.mxu0 %v2503
    %2567 = vmatpush1.bf16.msra.mxu0 %v2502
    %2568 = vmatprep.subr.bf16.mxu0 %v2505
    %2569 = vmatpush1.bf16.msra.mxu0 %v2504
    %2570 = vmatprep.subr.bf16.mxu0 %v2507
    %2571 = vmatpush1.bf16.msra.mxu0 %v2506
    %2572 = vmatprep.subr.bf16.mxu0 %v2509
    %2573 = vmatpush1.bf16.msra.mxu0 %v2508
    %2574 = vmatprep.subr.bf16.mxu0 %v2511
    %2575 = vmatpush1.bf16.msra.mxu0 %v2510
    %2576 = vmatprep.subr.bf16.mxu0 %v2513
    %2577 = vmatpush1.bf16.msra.mxu0 %v2512
    %2578 = vmatprep.subr.bf16.mxu0 %v2515
    %2579 = vmatpush1.bf16.msra.mxu0 %v2514
    %2580 = vmatprep.subr.bf16.mxu0 %v2517
    %2581 = vmatpush1.bf16.msra.mxu0 %v2516
    %2582 = vmatprep.subr.bf16.mxu0 %v2519
    %2583 = vmatpush1.bf16.msra.mxu0 %v2518
    %2584 = vmatprep.subr.bf16.mxu0 %v2521
    %2585 = vmatpush1.bf16.msra.mxu0 %v2520
    %2586 = vmatprep.subr.bf16.mxu0 %v2523
    %2587 = vmatpush1.bf16.msra.mxu0 %v2522
    %2588 = vmatprep.subr.bf16.mxu0 %v2525
    %2589 = vmatpush1.bf16.msra.mxu0 %v2524
    %2590 = vmatprep.subr.bf16.mxu0 %v2527
    %2591 = vmatpush1.bf16.msra.mxu0 %v2526
    %2592 = vmatprep.subr.bf16.mxu0 %v2529
    %2593 = vmatpush1.bf16.msra.mxu0 %v2528
    %2594 = vmatprep.subr.bf16.mxu0 %v2531
    %2595 = vmatpush1.bf16.msra.mxu0 %v2530
    %2596 = vmatprep.subr.bf16.mxu0 %v2533
    %2597 = vmatpush1.bf16.msra.mxu0 %v2532
    %2598 = vmatprep.mubr.bf16.mxu0 %v2373
    %2599 = vmatmul.mubr.bf16.gmra.mrb[0].mxu0 %v2372
    %v2600 = vpop.f32.mrb[0].mxu0
    %v2601 = vadd.f32 0.0, %v2600
    %v2602 = vpop.f32.mrb[0].mxu0
    %v2603 = vadd.f32 0.0, %v2602
    %v2604 = vpop.f32.mrb[0].mxu0
    %v2605 = vpop.f32.mrb[0].mxu0
    %2606 = vdwg.mxu0
    %v2607 = vld [vmem:[#allocation13] sm:$0xff]
    %v2608 = vld [vmem:[#allocation13 + $0x8] sm:$0xff]
    %v2609 = vld [vmem:[#allocation13 + $0x10] sm:$0xff]
    %v2610 = vld [vmem:[#allocation13 + $0x18] sm:$0xff]
    %v2611 = vld [vmem:[#allocation13 + $0x20] sm:$0xff]
    %v2612 = vld [vmem:[#allocation13 + $0x28] sm:$0xff]
    %v2613 = vld [vmem:[#allocation13 + $0x30] sm:$0xff]
    %v2614 = vld [vmem:[#allocation13 + $0x38] sm:$0xff]
    %v2615 = vld [vmem:[#allocation13 + $0x40] sm:$0xff]
    %v2616 = vld [vmem:[#allocation13 + $0x48] sm:$0xff]
    %v2617 = vld [vmem:[#allocation13 + $0x50] sm:$0xff]
    %v2618 = vld [vmem:[#allocation13 + $0x58] sm:$0xff]
    %v2619 = vld [vmem:[#allocation13 + $0x60] sm:$0xff]
    %v2620 = vld [vmem:[#allocation13 + $0x68] sm:$0xff]
    %v2621 = vld [vmem:[#allocation13 + $0x70] sm:$0xff]
    %v2622 = vld [vmem:[#allocation13 + $0x78] sm:$0xff]
    %v2623 = vld [vmem:[#allocation13 + $0x80] sm:$0xff]
    %v2624 = vld [vmem:[#allocation13 + $0x88] sm:$0xff]
    %v2625 = vld [vmem:[#allocation13 + $0x90] sm:$0xff]
    %v2626 = vld [vmem:[#allocation13 + $0x98] sm:$0xff]
    %v2627 = vld [vmem:[#allocation13 + $0xa0] sm:$0xff]
    %v2628 = vld [vmem:[#allocation13 + $0xa8] sm:$0xff]
    %v2629 = vld [vmem:[#allocation13 + $0xb0] sm:$0xff]
    %v2630 = vld [vmem:[#allocation13 + $0xb8] sm:$0xff]
    %v2631 = vld [vmem:[#allocation13 + $0xc0] sm:$0xff]
    %v2632 = vld [vmem:[#allocation13 + $0xc8] sm:$0xff]
    %v2633 = vld [vmem:[#allocation13 + $0xd0] sm:$0xff]
    %v2634 = vld [vmem:[#allocation13 + $0xd8] sm:$0xff]
    %v2635 = vld [vmem:[#allocation13 + $0xe0] sm:$0xff]
    %v2636 = vld [vmem:[#allocation13 + $0xe8] sm:$0xff]
    %v2637 = vld [vmem:[#allocation13 + $0xf0] sm:$0xff]
    %v2638 = vld [vmem:[#allocation13 + $0xf8] sm:$0xff]
    %v2671 = vunpack.c.l.b16 %v2607
    %v2672 = vunpack.c.h.b16 %v2607
    %v2673 = vunpack.c.l.b16 %v2608
    %v2674 = vunpack.c.h.b16 %v2608
    %v2675 = vunpack.c.l.b16 %v2609
    %v2676 = vunpack.c.h.b16 %v2609
    %v2677 = vunpack.c.l.b16 %v2610
    %v2678 = vunpack.c.h.b16 %v2610
    %v2679 = vunpack.c.l.b16 %v2611
    %v2680 = vunpack.c.h.b16 %v2611
    %v2681 = vunpack.c.l.b16 %v2612
    %v2682 = vunpack.c.h.b16 %v2612
    %v2683 = vunpack.c.l.b16 %v2613
    %v2684 = vunpack.c.h.b16 %v2613
    %v2685 = vunpack.c.l.b16 %v2614
    %v2686 = vunpack.c.h.b16 %v2614
    %v2687 = vunpack.c.l.b16 %v2615
    %v2688 = vunpack.c.h.b16 %v2615
    %v2689 = vunpack.c.l.b16 %v2616
    %v2690 = vunpack.c.h.b16 %v2616
    %v2691 = vunpack.c.l.b16 %v2617
    %v2692 = vunpack.c.h.b16 %v2617
    %v2693 = vunpack.c.l.b16 %v2618
    %v2694 = vunpack.c.h.b16 %v2618
    %v2695 = vunpack.c.l.b16 %v2619
    %v2696 = vunpack.c.h.b16 %v2619
    %v2697 = vunpack.c.l.b16 %v2620
    %v2698 = vunpack.c.h.b16 %v2620
    %v2699 = vunpack.c.l.b16 %v2621
    %v2700 = vunpack.c.h.b16 %v2621
    %v2701 = vunpack.c.l.b16 %v2622
    %v2702 = vunpack.c.h.b16 %v2622
    %v2703 = vunpack.c.l.b16 %v2623
    %v2704 = vunpack.c.h.b16 %v2623
    %v2705 = vunpack.c.l.b16 %v2624
    %v2706 = vunpack.c.h.b16 %v2624
    %v2707 = vunpack.c.l.b16 %v2625
    %v2708 = vunpack.c.h.b16 %v2625
    %v2709 = vunpack.c.l.b16 %v2626
    %v2710 = vunpack.c.h.b16 %v2626
    %v2711 = vunpack.c.l.b16 %v2627
    %v2712 = vunpack.c.h.b16 %v2627
    %v2713 = vunpack.c.l.b16 %v2628
    %v2714 = vunpack.c.h.b16 %v2628
    %v2715 = vunpack.c.l.b16 %v2629
    %v2716 = vunpack.c.h.b16 %v2629
    %v2717 = vunpack.c.l.b16 %v2630
    %v2718 = vunpack.c.h.b16 %v2630
    %v2719 = vunpack.c.l.b16 %v2631
    %v2720 = vunpack.c.h.b16 %v2631
    %v2721 = vunpack.c.l.b16 %v2632
    %v2722 = vunpack.c.h.b16 %v2632
    %v2723 = vunpack.c.l.b16 %v2633
    %v2724 = vunpack.c.h.b16 %v2633
    %v2725 = vunpack.c.l.b16 %v2634
    %v2726 = vunpack.c.h.b16 %v2634
    %v2727 = vunpack.c.l.b16 %v2635
    %v2728 = vunpack.c.h.b16 %v2635
    %v2729 = vunpack.c.l.b16 %v2636
    %v2730 = vunpack.c.h.b16 %v2636
    %v2731 = vunpack.c.l.b16 %v2637
    %v2732 = vunpack.c.h.b16 %v2637
    %v2733 = vunpack.c.l.b16 %v2638
    %v2734 = vunpack.c.h.b16 %v2638
    %v2735 = vpack.c.b16 %v2673, %v2671
    %v2736 = vpack.c.b16 %v2674, %v2672
    %v2737 = vpack.c.b16 %v2677, %v2675
    %v2738 = vpack.c.b16 %v2678, %v2676
    %v2739 = vpack.c.b16 %v2681, %v2679
    %v2740 = vpack.c.b16 %v2682, %v2680
    %v2741 = vpack.c.b16 %v2685, %v2683
    %v2742 = vpack.c.b16 %v2686, %v2684
    %v2743 = vpack.c.b16 %v2689, %v2687
    %v2744 = vpack.c.b16 %v2690, %v2688
    %v2745 = vpack.c.b16 %v2693, %v2691
    %v2746 = vpack.c.b16 %v2694, %v2692
    %v2747 = vpack.c.b16 %v2697, %v2695
    %v2748 = vpack.c.b16 %v2698, %v2696
    %v2749 = vpack.c.b16 %v2701, %v2699
    %v2750 = vpack.c.b16 %v2702, %v2700
    %v2751 = vpack.c.b16 %v2705, %v2703
    %v2752 = vpack.c.b16 %v2706, %v2704
    %v2753 = vpack.c.b16 %v2709, %v2707
    %v2754 = vpack.c.b16 %v2710, %v2708
    %v2755 = vpack.c.b16 %v2713, %v2711
    %v2756 = vpack.c.b16 %v2714, %v2712
    %v2757 = vpack.c.b16 %v2717, %v2715
    %v2758 = vpack.c.b16 %v2718, %v2716
    %v2759 = vpack.c.b16 %v2721, %v2719
    %v2760 = vpack.c.b16 %v2722, %v2720
    %v2761 = vpack.c.b16 %v2725, %v2723
    %v2762 = vpack.c.b16 %v2726, %v2724
    %v2763 = vpack.c.b16 %v2729, %v2727
    %v2764 = vpack.c.b16 %v2730, %v2728
    %v2765 = vpack.c.b16 %v2733, %v2731
    %v2766 = vpack.c.b16 %v2734, %v2732
    %2799 = vmatprep.subr.bf16.mxu0 %v2736
    %2800 = vmatpush1.bf16.msra.mxu0 %v2735
    %2801 = vmatprep.subr.bf16.mxu0 %v2738
    %2802 = vmatpush1.bf16.msra.mxu0 %v2737
    %2803 = vmatprep.subr.bf16.mxu0 %v2740
    %2804 = vmatpush1.bf16.msra.mxu0 %v2739
    %2805 = vmatprep.subr.bf16.mxu0 %v2742
    %2806 = vmatpush1.bf16.msra.mxu0 %v2741
    %2807 = vmatprep.subr.bf16.mxu0 %v2744
    %2808 = vmatpush1.bf16.msra.mxu0 %v2743
    %2809 = vmatprep.subr.bf16.mxu0 %v2746
    %2810 = vmatpush1.bf16.msra.mxu0 %v2745
    %2811 = vmatprep.subr.bf16.mxu0 %v2748
    %2812 = vmatpush1.bf16.msra.mxu0 %v2747
    %2813 = vmatprep.subr.bf16.mxu0 %v2750
    %2814 = vmatpush1.bf16.msra.mxu0 %v2749
    %2815 = vmatprep.subr.bf16.mxu0 %v2752
    %2816 = vmatpush1.bf16.msra.mxu0 %v2751
    %2817 = vmatprep.subr.bf16.mxu0 %v2754
    %2818 = vmatpush1.bf16.msra.mxu0 %v2753
    %2819 = vmatprep.subr.bf16.mxu0 %v2756
    %2820 = vmatpush1.bf16.msra.mxu0 %v2755
    %2821 = vmatprep.subr.bf16.mxu0 %v2758
    %2822 = vmatpush1.bf16.msra.mxu0 %v2757
    %2823 = vmatprep.subr.bf16.mxu0 %v2760
    %2824 = vmatpush1.bf16.msra.mxu0 %v2759
    %2825 = vmatprep.subr.bf16.mxu0 %v2762
    %2826 = vmatpush1.bf16.msra.mxu0 %v2761
    %2827 = vmatprep.subr.bf16.mxu0 %v2764
    %2828 = vmatpush1.bf16.msra.mxu0 %v2763
    %2829 = vmatprep.subr.bf16.mxu0 %v2766
    %2830 = vmatpush1.bf16.msra.mxu0 %v2765
    %2831 = vmatprep.mubr.bf16.mxu0 %v2373
    %2832 = vmatmul.mubr.bf16.gmra.mrb[0].mxu0 %v2372
    %v2833 = vpop.f32.mrb[0].mxu0
    %v2834 = vadd.f32 0.0, %v2833
    %v2835 = vpop.f32.mrb[0].mxu0
    %v2836 = vadd.f32 0.0, %v2835
    %v2837 = vpop.f32.mrb[0].mxu0
    %v2838 = vpop.f32.mrb[0].mxu0
    %2839 = vdwg.mxu0
    %v2840 = vadd.f32 %v2601, %v2834
    %v2841 = vadd.f32 %v2603, %v2836
    %v2842 = vmul.f32 %v2601, %v2834
    %v2843 = vmul.f32 %v2603, %v2836
    %v2844 = vsub.f32 %v2840, %v2842
    %v2845 = vsub.f32 %v2841, %v2843
    %v2846 = vsub.f32 1.0, %v2844
    %v2847 = vsub.f32 1.0, %v2845
    %v2848 = vpack.c.bf16 %v2846, %v2846
    %v2849 = vpack.c.bf16 %v2847, %v2847
    %v2850 = vld [vmem:[#allocation14] sm:$0xff]
    %v2851 = vld [vmem:[#allocation14 + $0x8] sm:$0xff]
    %v2852 = vld [vmem:[#allocation14 + $0x10] sm:$0xff]
    %v2853 = vld [vmem:[#allocation14 + $0x18] sm:$0xff]
    %v2854 = vld [vmem:[#allocation14 + $0x20] sm:$0xff]
    %v2855 = vld [vmem:[#allocation14 + $0x28] sm:$0xff]
    %v2856 = vld [vmem:[#allocation14 + $0x30] sm:$0xff]
    %v2857 = vld [vmem:[#allocation14 + $0x38] sm:$0xff]
    %v2858 = vld [vmem:[#allocation14 + $0x40] sm:$0xff]
    %v2859 = vld [vmem:[#allocation14 + $0x48] sm:$0xff]
    %v2860 = vld [vmem:[#allocation14 + $0x50] sm:$0xff]
    %v2861 = vld [vmem:[#allocation14 + $0x58] sm:$0xff]
    %v2862 = vld [vmem:[#allocation14 + $0x60] sm:$0xff]
    %v2863 = vld [vmem:[#allocation14 + $0x68] sm:$0xff]
    %v2864 = vld [vmem:[#allocation14 + $0x70] sm:$0xff]
    %v2865 = vld [vmem:[#allocation14 + $0x78] sm:$0xff]
    %v2866 = vld [vmem:[#allocation14 + $0x80] sm:$0xff]
    %v2867 = vld [vmem:[#allocation14 + $0x88] sm:$0xff]
    %v2868 = vld [vmem:[#allocation14 + $0x90] sm:$0xff]
    %v2869 = vld [vmem:[#allocation14 + $0x98] sm:$0xff]
    %v2870 = vld [vmem:[#allocation14 + $0xa0] sm:$0xff]
    %v2871 = vld [vmem:[#allocation14 + $0xa8] sm:$0xff]
    %v2872 = vld [vmem:[#allocation14 + $0xb0] sm:$0xff]
    %v2873 = vld [vmem:[#allocation14 + $0xb8] sm:$0xff]
    %v2874 = vld [vmem:[#allocation14 + $0xc0] sm:$0xff]
    %v2875 = vld [vmem:[#allocation14 + $0xc8] sm:$0xff]
    %v2876 = vld [vmem:[#allocation14 + $0xd0] sm:$0xff]
    %v2877 = vld [vmem:[#allocation14 + $0xd8] sm:$0xff]
    %v2878 = vld [vmem:[#allocation14 + $0xe0] sm:$0xff]
    %v2879 = vld [vmem:[#allocation14 + $0xe8] sm:$0xff]
    %v2880 = vld [vmem:[#allocation14 + $0xf0] sm:$0xff]
    %v2881 = vld [vmem:[#allocation14 + $0xf8] sm:$0xff]
    %v2914 = vunpack.c.l.b16 %v2850
    %v2915 = vunpack.c.h.b16 %v2850
    %v2916 = vunpack.c.l.b16 %v2851
    %v2917 = vunpack.c.h.b16 %v2851
    %v2918 = vunpack.c.l.b16 %v2852
    %v2919 = vunpack.c.h.b16 %v2852
    %v2920 = vunpack.c.l.b16 %v2853
    %v2921 = vunpack.c.h.b16 %v2853
    %v2922 = vunpack.c.l.b16 %v2854
    %v2923 = vunpack.c.h.b16 %v2854
    %v2924 = vunpack.c.l.b16 %v2855
    %v2925 = vunpack.c.h.b16 %v2855
    %v2926 = vunpack.c.l.b16 %v2856
    %v2927 = vunpack.c.h.b16 %v2856
    %v2928 = vunpack.c.l.b16 %v2857
    %v2929 = vunpack.c.h.b16 %v2857
    %v2930 = vunpack.c.l.b16 %v2858
    %v2931 = vunpack.c.h.b16 %v2858
    %v2932 = vunpack.c.l.b16 %v2859
    %v2933 = vunpack.c.h.b16 %v2859
    %v2934 = vunpack.c.l.b16 %v2860
    %v2935 = vunpack.c.h.b16 %v2860
    %v2936 = vunpack.c.l.b16 %v2861
    %v2937 = vunpack.c.h.b16 %v2861
    %v2938 = vunpack.c.l.b16 %v2862
    %v2939 = vunpack.c.h.b16 %v2862
    %v2940 = vunpack.c.l.b16 %v2863
    %v2941 = vunpack.c.h.b16 %v2863
    %v2942 = vunpack.c.l.b16 %v2864
    %v2943 = vunpack.c.h.b16 %v2864
    %v2944 = vunpack.c.l.b16 %v2865
    %v2945 = vunpack.c.h.b16 %v2865
    %v2946 = vunpack.c.l.b16 %v2866
    %v2947 = vunpack.c.h.b16 %v2866
    %v2948 = vunpack.c.l.b16 %v2867
    %v2949 = vunpack.c.h.b16 %v2867
    %v2950 = vunpack.c.l.b16 %v2868
    %v2951 = vunpack.c.h.b16 %v2868
    %v2952 = vunpack.c.l.b16 %v2869
    %v2953 = vunpack.c.h.b16 %v2869
    %v2954 = vunpack.c.l.b16 %v2870
    %v2955 = vunpack.c.h.b16 %v2870
    %v2956 = vunpack.c.l.b16 %v2871
    %v2957 = vunpack.c.h.b16 %v2871
    %v2958 = vunpack.c.l.b16 %v2872
    %v2959 = vunpack.c.h.b16 %v2872
    %v2960 = vunpack.c.l.b16 %v2873
    %v2961 = vunpack.c.h.b16 %v2873
    %v2962 = vunpack.c.l.b16 %v2874
    %v2963 = vunpack.c.h.b16 %v2874
    %v2964 = vunpack.c.l.b16 %v2875
    %v2965 = vunpack.c.h.b16 %v2875
    %v2966 = vunpack.c.l.b16 %v2876
    %v2967 = vunpack.c.h.b16 %v2876
    %v2968 = vunpack.c.l.b16 %v2877
    %v2969 = vunpack.c.h.b16 %v2877
    %v2970 = vunpack.c.l.b16 %v2878
    %v2971 = vunpack.c.h.b16 %v2878
    %v2972 = vunpack.c.l.b16 %v2879
    %v2973 = vunpack.c.h.b16 %v2879
    %v2974 = vunpack.c.l.b16 %v2880
    %v2975 = vunpack.c.h.b16 %v2880
    %v2976 = vunpack.c.l.b16 %v2881
    %v2977 = vunpack.c.h.b16 %v2881
    %v2978 = vpack.c.b16 %v2916, %v2914
    %v2979 = vpack.c.b16 %v2917, %v2915
    %v2980 = vpack.c.b16 %v2920, %v2918
    %v2981 = vpack.c.b16 %v2921, %v2919
    %v2982 = vpack.c.b16 %v2924, %v2922
    %v2983 = vpack.c.b16 %v2925, %v2923
    %v2984 = vpack.c.b16 %v2928, %v2926
    %v2985 = vpack.c.b16 %v2929, %v2927
    %v2986 = vpack.c.b16 %v2932, %v2930
    %v2987 = vpack.c.b16 %v2933, %v2931
    %v2988 = vpack.c.b16 %v2936, %v2934
    %v2989 = vpack.c.b16 %v2937, %v2935
    %v2990 = vpack.c.b16 %v2940, %v2938
    %v2991 = vpack.c.b16 %v2941, %v2939
    %v2992 = vpack.c.b16 %v2944, %v2942
    %v2993 = vpack.c.b16 %v2945, %v2943
    %v2994 = vpack.c.b16 %v2948, %v2946
    %v2995 = vpack.c.b16 %v2949, %v2947
    %v2996 = vpack.c.b16 %v2952, %v2950
    %v2997 = vpack.c.b16 %v2953, %v2951
    %v2998 = vpack.c.b16 %v2956, %v2954
    %v2999 = vpack.c.b16 %v2957, %v2955
    %v3000 = vpack.c.b16 %v2960, %v2958
    %v3001 = vpack.c.b16 %v2961, %v2959
    %v3002 = vpack.c.b16 %v2964, %v2962
    %v3003 = vpack.c.b16 %v2965, %v2963
    %v3004 = vpack.c.b16 %v2968, %v2966
    %v3005 = vpack.c.b16 %v2969, %v2967
    %v3006 = vpack.c.b16 %v2972, %v2970
    %v3007 = vpack.c.b16 %v2973, %v2971
    %v3008 = vpack.c.b16 %v2976, %v2974
    %v3009 = vpack.c.b16 %v2977, %v2975
    %3042 = vmatprep.subr.bf16.mxu0 %v2979
    %3043 = vmatpush1.bf16.msra.mxu0 %v2978
    %3044 = vmatprep.subr.bf16.mxu0 %v2981
    %3045 = vmatpush1.bf16.msra.mxu0 %v2980
    %3046 = vmatprep.subr.bf16.mxu0 %v2983
    %3047 = vmatpush1.bf16.msra.mxu0 %v2982
    %3048 = vmatprep.subr.bf16.mxu0 %v2985
    %3049 = vmatpush1.bf16.msra.mxu0 %v2984
    %3050 = vmatprep.subr.bf16.mxu0 %v2987
    %3051 = vmatpush1.bf16.msra.mxu0 %v2986
    %3052 = vmatprep.subr.bf16.mxu0 %v2989
    %3053 = vmatpush1.bf16.msra.mxu0 %v2988
    %3054 = vmatprep.subr.bf16.mxu0 %v2991
    %3055 = vmatpush1.bf16.msra.mxu0 %v2990
    %3056 = vmatprep.subr.bf16.mxu0 %v2993
    %3057 = vmatpush1.bf16.msra.mxu0 %v2992
    %3058 = vmatprep.subr.bf16.mxu0 %v2995
    %3059 = vmatpush1.bf16.msra.mxu0 %v2994
    %3060 = vmatprep.subr.bf16.mxu0 %v2997
    %3061 = vmatpush1.bf16.msra.mxu0 %v2996
    %3062 = vmatprep.subr.bf16.mxu0 %v2999
    %3063 = vmatpush1.bf16.msra.mxu0 %v2998
    %3064 = vmatprep.subr.bf16.mxu0 %v3001
    %3065 = vmatpush1.bf16.msra.mxu0 %v3000
    %3066 = vmatprep.subr.bf16.mxu0 %v3003
    %3067 = vmatpush1.bf16.msra.mxu0 %v3002
    %3068 = vmatprep.subr.bf16.mxu0 %v3005
    %3069 = vmatpush1.bf16.msra.mxu0 %v3004
    %3070 = vmatprep.subr.bf16.mxu0 %v3007
    %3071 = vmatpush1.bf16.msra.mxu0 %v3006
    %3072 = vmatprep.subr.bf16.mxu0 %v3009
    %3073 = vmatpush1.bf16.msra.mxu0 %v3008
    %3074 = vmatprep.mubr.bf16.mxu0 %v2849
    %3075 = vmatmul.mubr.bf16.gmra.mrb[0].mxu0 %v2848
    %v3076 = vpop.f32.mrb[0].mxu0
    %v3077 = vadd.f32 0.0, %v3076
    %v3078 = vpop.f32.mrb[0].mxu0
    %v3079 = vadd.f32 0.0, %v3078
    %v3080 = vpop.f32.mrb[0].mxu0
    %v3081 = vpop.f32.mrb[0].mxu0
    %3082 = vdwg.mxu0
    %v3083 = vld [vmem:[#allocation16] sm:$0xff]
    %v3084 = vld [vmem:[#allocation16 + $0x8] sm:$0xff]
    %v3085 = vld [vmem:[#allocation16 + $0x10] sm:$0xff]
    %v3086 = vld [vmem:[#allocation16 + $0x18] sm:$0xff]
    %v3087 = vld [vmem:[#allocation16 + $0x20] sm:$0xff]
    %v3088 = vld [vmem:[#allocation16 + $0x28] sm:$0xff]
    %v3089 = vld [vmem:[#allocation16 + $0x30] sm:$0xff]
    %v3090 = vld [vmem:[#allocation16 + $0x38] sm:$0xff]
    %v3091 = vld [vmem:[#allocation16 + $0x40] sm:$0xff]
    %v3092 = vld [vmem:[#allocation16 + $0x48] sm:$0xff]
    %v3093 = vld [vmem:[#allocation16 + $0x50] sm:$0xff]
    %v3094 = vld [vmem:[#allocation16 + $0x58] sm:$0xff]
    %v3095 = vld [vmem:[#allocation16 + $0x60] sm:$0xff]
    %v3096 = vld [vmem:[#allocation16 + $0x68] sm:$0xff]
    %v3097 = vld [vmem:[#allocation16 + $0x70] sm:$0xff]
    %v3098 = vld [vmem:[#allocation16 + $0x78] sm:$0xff]
    %v3099 = vld [vmem:[#allocation16 + $0x80] sm:$0xff]
    %v3100 = vld [vmem:[#allocation16 + $0x88] sm:$0xff]
    %v3101 = vld [vmem:[#allocation16 + $0x90] sm:$0xff]
    %v3102 = vld [vmem:[#allocation16 + $0x98] sm:$0xff]
    %v3103 = vld [vmem:[#allocation16 + $0xa0] sm:$0xff]
    %v3104 = vld [vmem:[#allocation16 + $0xa8] sm:$0xff]
    %v3105 = vld [vmem:[#allocation16 + $0xb0] sm:$0xff]
    %v3106 = vld [vmem:[#allocation16 + $0xb8] sm:$0xff]
    %v3107 = vld [vmem:[#allocation16 + $0xc0] sm:$0xff]
    %v3108 = vld [vmem:[#allocation16 + $0xc8] sm:$0xff]
    %v3109 = vld [vmem:[#allocation16 + $0xd0] sm:$0xff]
    %v3110 = vld [vmem:[#allocation16 + $0xd8] sm:$0xff]
    %v3111 = vld [vmem:[#allocation16 + $0xe0] sm:$0xff]
    %v3112 = vld [vmem:[#allocation16 + $0xe8] sm:$0xff]
    %v3113 = vld [vmem:[#allocation16 + $0xf0] sm:$0xff]
    %v3114 = vld [vmem:[#allocation16 + $0xf8] sm:$0xff]
    %v3147 = vunpack.c.l.b16 %v3083
    %v3148 = vunpack.c.h.b16 %v3083
    %v3149 = vunpack.c.l.b16 %v3084
    %v3150 = vunpack.c.h.b16 %v3084
    %v3151 = vunpack.c.l.b16 %v3085
    %v3152 = vunpack.c.h.b16 %v3085
    %v3153 = vunpack.c.l.b16 %v3086
    %v3154 = vunpack.c.h.b16 %v3086
    %v3155 = vunpack.c.l.b16 %v3087
    %v3156 = vunpack.c.h.b16 %v3087
    %v3157 = vunpack.c.l.b16 %v3088
    %v3158 = vunpack.c.h.b16 %v3088
    %v3159 = vunpack.c.l.b16 %v3089
    %v3160 = vunpack.c.h.b16 %v3089
    %v3161 = vunpack.c.l.b16 %v3090
    %v3162 = vunpack.c.h.b16 %v3090
    %v3163 = vunpack.c.l.b16 %v3091
    %v3164 = vunpack.c.h.b16 %v3091
    %v3165 = vunpack.c.l.b16 %v3092
    %v3166 = vunpack.c.h.b16 %v3092
    %v3167 = vunpack.c.l.b16 %v3093
    %v3168 = vunpack.c.h.b16 %v3093
    %v3169 = vunpack.c.l.b16 %v3094
    %v3170 = vunpack.c.h.b16 %v3094
    %v3171 = vunpack.c.l.b16 %v3095
    %v3172 = vunpack.c.h.b16 %v3095
    %v3173 = vunpack.c.l.b16 %v3096
    %v3174 = vunpack.c.h.b16 %v3096
    %v3175 = vunpack.c.l.b16 %v3097
    %v3176 = vunpack.c.h.b16 %v3097
    %v3177 = vunpack.c.l.b16 %v3098
    %v3178 = vunpack.c.h.b16 %v3098
    %v3179 = vunpack.c.l.b16 %v3099
    %v3180 = vunpack.c.h.b16 %v3099
    %v3181 = vunpack.c.l.b16 %v3100
    %v3182 = vunpack.c.h.b16 %v3100
    %v3183 = vunpack.c.l.b16 %v3101
    %v3184 = vunpack.c.h.b16 %v3101
    %v3185 = vunpack.c.l.b16 %v3102
    %v3186 = vunpack.c.h.b16 %v3102
    %v3187 = vunpack.c.l.b16 %v3103
    %v3188 = vunpack.c.h.b16 %v3103
    %v3189 = vunpack.c.l.b16 %v3104
    %v3190 = vunpack.c.h.b16 %v3104
    %v3191 = vunpack.c.l.b16 %v3105
    %v3192 = vunpack.c.h.b16 %v3105
    %v3193 = vunpack.c.l.b16 %v3106
    %v3194 = vunpack.c.h.b16 %v3106
    %v3195 = vunpack.c.l.b16 %v3107
    %v3196 = vunpack.c.h.b16 %v3107
    %v3197 = vunpack.c.l.b16 %v3108
    %v3198 = vunpack.c.h.b16 %v3108
    %v3199 = vunpack.c.l.b16 %v3109
    %v3200 = vunpack.c.h.b16 %v3109
    %v3201 = vunpack.c.l.b16 %v3110
    %v3202 = vunpack.c.h.b16 %v3110
    %v3203 = vunpack.c.l.b16 %v3111
    %v3204 = vunpack.c.h.b16 %v3111
    %v3205 = vunpack.c.l.b16 %v3112
    %v3206 = vunpack.c.h.b16 %v3112
    %v3207 = vunpack.c.l.b16 %v3113
    %v3208 = vunpack.c.h.b16 %v3113
    %v3209 = vunpack.c.l.b16 %v3114
    %v3210 = vunpack.c.h.b16 %v3114
    %v3211 = vpack.c.b16 %v3149, %v3147
    %v3212 = vpack.c.b16 %v3150, %v3148
    %v3213 = vpack.c.b16 %v3153, %v3151
    %v3214 = vpack.c.b16 %v3154, %v3152
    %v3215 = vpack.c.b16 %v3157, %v3155
    %v3216 = vpack.c.b16 %v3158, %v3156
    %v3217 = vpack.c.b16 %v3161, %v3159
    %v3218 = vpack.c.b16 %v3162, %v3160
    %v3219 = vpack.c.b16 %v3165, %v3163
    %v3220 = vpack.c.b16 %v3166, %v3164
    %v3221 = vpack.c.b16 %v3169, %v3167
    %v3222 = vpack.c.b16 %v3170, %v3168
    %v3223 = vpack.c.b16 %v3173, %v3171
    %v3224 = vpack.c.b16 %v3174, %v3172
    %v3225 = vpack.c.b16 %v3177, %v3175
    %v3226 = vpack.c.b16 %v3178, %v3176
    %v3227 = vpack.c.b16 %v3181, %v3179
    %v3228 = vpack.c.b16 %v3182, %v3180
    %v3229 = vpack.c.b16 %v3185, %v3183
    %v3230 = vpack.c.b16 %v3186, %v3184
    %v3231 = vpack.c.b16 %v3189, %v3187
    %v3232 = vpack.c.b16 %v3190, %v3188
    %v3233 = vpack.c.b16 %v3193, %v3191
    %v3234 = vpack.c.b16 %v3194, %v3192
    %v3235 = vpack.c.b16 %v3197, %v3195
    %v3236 = vpack.c.b16 %v3198, %v3196
    %v3237 = vpack.c.b16 %v3201, %v3199
    %v3238 = vpack.c.b16 %v3202, %v3200
    %v3239 = vpack.c.b16 %v3205, %v3203
    %v3240 = vpack.c.b16 %v3206, %v3204
    %v3241 = vpack.c.b16 %v3209, %v3207
    %v3242 = vpack.c.b16 %v3210, %v3208
    %3275 = vmatprep.subr.bf16.mxu0 %v3212
    %3276 = vmatpush1.bf16.msra.mxu0 %v3211
    %3277 = vmatprep.subr.bf16.mxu0 %v3214
    %3278 = vmatpush1.bf16.msra.mxu0 %v3213
    %3279 = vmatprep.subr.bf16.mxu0 %v3216
    %3280 = vmatpush1.bf16.msra.mxu0 %v3215
    %3281 = vmatprep.subr.bf16.mxu0 %v3218
    %3282 = vmatpush1.bf16.msra.mxu0 %v3217
    %3283 = vmatprep.subr.bf16.mxu0 %v3220
    %3284 = vmatpush1.bf16.msra.mxu0 %v3219
    %3285 = vmatprep.subr.bf16.mxu0 %v3222
    %3286 = vmatpush1.bf16.msra.mxu0 %v3221
    %3287 = vmatprep.subr.bf16.mxu0 %v3224
    %3288 = vmatpush1.bf16.msra.mxu0 %v3223
    %3289 = vmatprep.subr.bf16.mxu0 %v3226
    %3290 = vmatpush1.bf16.msra.mxu0 %v3225
    %3291 = vmatprep.subr.bf16.mxu0 %v3228
    %3292 = vmatpush1.bf16.msra.mxu0 %v3227
    %3293 = vmatprep.subr.bf16.mxu0 %v3230
    %3294 = vmatpush1.bf16.msra.mxu0 %v3229
    %3295 = vmatprep.subr.bf16.mxu0 %v3232
    %3296 = vmatpush1.bf16.msra.mxu0 %v3231
    %3297 = vmatprep.subr.bf16.mxu0 %v3234
    %3298 = vmatpush1.bf16.msra.mxu0 %v3233
    %3299 = vmatprep.subr.bf16.mxu0 %v3236
    %3300 = vmatpush1.bf16.msra.mxu0 %v3235
    %3301 = vmatprep.subr.bf16.mxu0 %v3238
    %3302 = vmatpush1.bf16.msra.mxu0 %v3237
    %3303 = vmatprep.subr.bf16.mxu0 %v3240
    %3304 = vmatpush1.bf16.msra.mxu0 %v3239
    %3305 = vmatprep.subr.bf16.mxu0 %v3242
    %3306 = vmatpush1.bf16.msra.mxu0 %v3241
    %3307 = vmatprep.mubr.bf16.mxu0 %v2849
    %3308 = vmatmul.mubr.bf16.gmra.mrb[0].mxu0 %v2848
    %v3309 = vpop.f32.mrb[0].mxu0
    %v3310 = vadd.f32 0.0, %v3309
    %v3311 = vpop.f32.mrb[0].mxu0
    %v3312 = vadd.f32 0.0, %v3311
    %v3313 = vpop.f32.mrb[0].mxu0
    %v3314 = vpop.f32.mrb[0].mxu0
    %3315 = vdwg.mxu0
    %v3316 = vadd.f32 %v3077, %v3310
    %v3317 = vadd.f32 %v3079, %v3312
    %v3318 = vmul.f32 %v3077, %v3310
    %v3319 = vmul.f32 %v3079, %v3312
    %v3320 = vsub.f32 %v3316, %v3318
    %v3321 = vsub.f32 %v3317, %v3319
    %v3322 = vsub.f32 1.0, %v3320
    %v3323 = vsub.f32 1.0, %v3321
    %v3324 = vpack.c.bf16 %v3322, %v3322
    %v3325 = vpack.c.bf16 %v3323, %v3323
    %v3326 = vld [vmem:[#allocation17] sm:$0xf]
    %v3327 = vld [vmem:[#allocation17 + $0x4] sm:$0xf]
    %v3328 = vld [vmem:[#allocation17 + $0x8] sm:$0xf]
    %v3329 = vld [vmem:[#allocation17 + $0xc] sm:$0xf]
    %v3330 = vld [vmem:[#allocation17 + $0x10] sm:$0xf]
    %v3331 = vld [vmem:[#allocation17 + $0x14] sm:$0xf]
    %v3332 = vld [vmem:[#allocation17 + $0x18] sm:$0xf]
    %v3333 = vld [vmem:[#allocation17 + $0x1c] sm:$0xf]
    %v3334 = vld [vmem:[#allocation17 + $0x20] sm:$0xf]
    %v3335 = vld [vmem:[#allocation17 + $0x24] sm:$0xf]
    %v3336 = vld [vmem:[#allocation17 + $0x28] sm:$0xf]
    %v3337 = vld [vmem:[#allocation17 + $0x2c] sm:$0xf]
    %v3338 = vld [vmem:[#allocation17 + $0x30] sm:$0xf]
    %v3339 = vld [vmem:[#allocation17 + $0x34] sm:$0xf]
    %v3340 = vld [vmem:[#allocation17 + $0x38] sm:$0xf]
    %v3341 = vld [vmem:[#allocation17 + $0x3c] sm:$0xf]
    %v3342 = vld [vmem:[#allocation17 + $0x40] sm:$0xf]
    %v3343 = vld [vmem:[#allocation17 + $0x44] sm:$0xf]
    %v3344 = vld [vmem:[#allocation17 + $0x48] sm:$0xf]
    %v3345 = vld [vmem:[#allocation17 + $0x4c] sm:$0xf]
    %v3346 = vld [vmem:[#allocation17 + $0x50] sm:$0xf]
    %v3347 = vld [vmem:[#allocation17 + $0x54] sm:$0xf]
    %v3348 = vld [vmem:[#allocation17 + $0x58] sm:$0xf]
    %v3349 = vld [vmem:[#allocation17 + $0x5c] sm:$0xf]
    %v3350 = vld [vmem:[#allocation17 + $0x60] sm:$0xf]
    %v3351 = vld [vmem:[#allocation17 + $0x64] sm:$0xf]
    %v3352 = vld [vmem:[#allocation17 + $0x68] sm:$0xf]
    %v3353 = vld [vmem:[#allocation17 + $0x6c] sm:$0xf]
    %v3354 = vld [vmem:[#allocation17 + $0x70] sm:$0xf]
    %v3355 = vld [vmem:[#allocation17 + $0x74] sm:$0xf]
    %v3356 = vld [vmem:[#allocation17 + $0x78] sm:$0xf]
    %v3357 = vld [vmem:[#allocation17 + $0x7c] sm:$0xf]
    %v3390 = vunpack.c.l.b16 %v3326
    %v3391 = vunpack.c.l.b16 %v3327
    %v3392 = vunpack.c.l.b16 %v3328
    %v3393 = vunpack.c.l.b16 %v3329
    %v3394 = vunpack.c.l.b16 %v3330
    %v3395 = vunpack.c.l.b16 %v3331
    %v3396 = vunpack.c.l.b16 %v3332
    %v3397 = vunpack.c.l.b16 %v3333
    %v3398 = vunpack.c.l.b16 %v3334
    %v3399 = vunpack.c.l.b16 %v3335
    %v3400 = vunpack.c.l.b16 %v3336
    %v3401 = vunpack.c.l.b16 %v3337
    %v3402 = vunpack.c.l.b16 %v3338
    %v3403 = vunpack.c.l.b16 %v3339
    %v3404 = vunpack.c.l.b16 %v3340
    %v3405 = vunpack.c.l.b16 %v3341
    %v3406 = vunpack.c.l.b16 %v3342
    %v3407 = vunpack.c.l.b16 %v3343
    %v3408 = vunpack.c.l.b16 %v3344
    %v3409 = vunpack.c.l.b16 %v3345
    %v3410 = vunpack.c.l.b16 %v3346
    %v3411 = vunpack.c.l.b16 %v3347
    %v3412 = vunpack.c.l.b16 %v3348
    %v3413 = vunpack.c.l.b16 %v3349
    %v3414 = vunpack.c.l.b16 %v3350
    %v3415 = vunpack.c.l.b16 %v3351
    %v3416 = vunpack.c.l.b16 %v3352
    %v3417 = vunpack.c.l.b16 %v3353
    %v3418 = vunpack.c.l.b16 %v3354
    %v3419 = vunpack.c.l.b16 %v3355
    %v3420 = vunpack.c.l.b16 %v3356
    %v3421 = vunpack.c.l.b16 %v3357
    %v3422 = vpack.c.b16 %v3391, %v3390
    %v3423 = vpack.c.b16 %v3393, %v3392
    %v3424 = vpack.c.b16 %v3395, %v3394
    %v3425 = vpack.c.b16 %v3397, %v3396
    %v3426 = vpack.c.b16 %v3399, %v3398
    %v3427 = vpack.c.b16 %v3401, %v3400
    %v3428 = vpack.c.b16 %v3403, %v3402
    %v3429 = vpack.c.b16 %v3405, %v3404
    %v3430 = vpack.c.b16 %v3407, %v3406
    %v3431 = vpack.c.b16 %v3409, %v3408
    %v3432 = vpack.c.b16 %v3411, %v3410
    %v3433 = vpack.c.b16 %v3413, %v3412
    %v3434 = vpack.c.b16 %v3415, %v3414
    %v3435 = vpack.c.b16 %v3417, %v3416
    %v3436 = vpack.c.b16 %v3419, %v3418
    %v3437 = vpack.c.b16 %v3421, %v3420
    %3454 = vmatprep.subr.bf16.mxu0 0
    %3455 = vmatpush1.bf16.msra.mxu0 %v3422
    %3456 = vmatprep.subr.bf16.mxu0 0
    %3457 = vmatpush1.bf16.msra.mxu0 %v3423
    %3458 = vmatprep.subr.bf16.mxu0 0
    %3459 = vmatpush1.bf16.msra.mxu0 %v3424
    %3460 = vmatprep.subr.bf16.mxu0 0
    %3461 = vmatpush1.bf16.msra.mxu0 %v3425
    %3462 = vmatprep.subr.bf16.mxu0 0
    %3463 = vmatpush1.bf16.msra.mxu0 %v3426
    %3464 = vmatprep.subr.bf16.mxu0 0
    %3465 = vmatpush1.bf16.msra.mxu0 %v3427
    %3466 = vmatprep.subr.bf16.mxu0 0
    %3467 = vmatpush1.bf16.msra.mxu0 %v3428
    %3468 = vmatprep.subr.bf16.mxu0 0
    %3469 = vmatpush1.bf16.msra.mxu0 %v3429
    %3470 = vmatprep.subr.bf16.mxu0 0
    %3471 = vmatpush1.bf16.msra.mxu0 %v3430
    %3472 = vmatprep.subr.bf16.mxu0 0
    %3473 = vmatpush1.bf16.msra.mxu0 %v3431
    %3474 = vmatprep.subr.bf16.mxu0 0
    %3475 = vmatpush1.bf16.msra.mxu0 %v3432
    %3476 = vmatprep.subr.bf16.mxu0 0
    %3477 = vmatpush1.bf16.msra.mxu0 %v3433
    %3478 = vmatprep.subr.bf16.mxu0 0
    %3479 = vmatpush1.bf16.msra.mxu0 %v3434
    %3480 = vmatprep.subr.bf16.mxu0 0
    %3481 = vmatpush1.bf16.msra.mxu0 %v3435
    %3482 = vmatprep.subr.bf16.mxu0 0
    %3483 = vmatpush1.bf16.msra.mxu0 %v3436
    %3484 = vmatprep.subr.bf16.mxu0 0
    %3485 = vmatpush1.bf16.msra.mxu0 %v3437
    %3486 = vmatprep.mubr.bf16.mxu0 %v3325
    %3487 = vmatmul.mubr.bf16.gmra.mrb[0].mxu0 %v3324
    %v3488 = vpop.f32.mrb[0].mxu0
    %v3489 = vadd.f32 0.0, %v3488
    %v3490 = vpop.f32.mrb[0].mxu0
    %v3491 = vpop.f32.mrb[0].mxu0
    %v3492 = vpop.f32.mrb[0].mxu0
    %3493 = vdwg.mxu0
    %v3494 = vld [vmem:[#allocation19] sm:$0xf]
    %v3495 = vld [vmem:[#allocation19 + $0x4] sm:$0xf]
    %v3496 = vld [vmem:[#allocation19 + $0x8] sm:$0xf]
    %v3497 = vld [vmem:[#allocation19 + $0xc] sm:$0xf]
    %v3498 = vld [vmem:[#allocation19 + $0x10] sm:$0xf]
    %v3499 = vld [vmem:[#allocation19 + $0x14] sm:$0xf]
    %v3500 = vld [vmem:[#allocation19 + $0x18] sm:$0xf]
    %v3501 = vld [vmem:[#allocation19 + $0x1c] sm:$0xf]
    %v3502 = vld [vmem:[#allocation19 + $0x20] sm:$0xf]
    %v3503 = vld [vmem:[#allocation19 + $0x24] sm:$0xf]
    %v3504 = vld [vmem:[#allocation19 + $0x28] sm:$0xf]
    %v3505 = vld [vmem:[#allocation19 + $0x2c] sm:$0xf]
    %v3506 = vld [vmem:[#allocation19 + $0x30] sm:$0xf]
    %v3507 = vld [vmem:[#allocation19 + $0x34] sm:$0xf]
    %v3508 = vld [vmem:[#allocation19 + $0x38] sm:$0xf]
    %v3509 = vld [vmem:[#allocation19 + $0x3c] sm:$0xf]
    %v3510 = vld [vmem:[#allocation19 + $0x40] sm:$0xf]
    %v3511 = vld [vmem:[#allocation19 + $0x44] sm:$0xf]
    %v3512 = vld [vmem:[#allocation19 + $0x48] sm:$0xf]
    %v3513 = vld [vmem:[#allocation19 + $0x4c] sm:$0xf]
    %v3514 = vld [vmem:[#allocation19 + $0x50] sm:$0xf]
    %v3515 = vld [vmem:[#allocation19 + $0x54] sm:$0xf]
    %v3516 = vld [vmem:[#allocation19 + $0x58] sm:$0xf]
    %v3517 = vld [vmem:[#allocation19 + $0x5c] sm:$0xf]
    %v3518 = vld [vmem:[#allocation19 + $0x60] sm:$0xf]
    %v3519 = vld [vmem:[#allocation19 + $0x64] sm:$0xf]
    %v3520 = vld [vmem:[#allocation19 + $0x68] sm:$0xf]
    %v3521 = vld [vmem:[#allocation19 + $0x6c] sm:$0xf]
    %v3522 = vld [vmem:[#allocation19 + $0x70] sm:$0xf]
    %v3523 = vld [vmem:[#allocation19 + $0x74] sm:$0xf]
    %v3524 = vld [vmem:[#allocation19 + $0x78] sm:$0xf]
    %v3525 = vld [vmem:[#allocation19 + $0x7c] sm:$0xf]
    %v3558 = vunpack.c.l.b16 %v3494
    %v3559 = vunpack.c.l.b16 %v3495
    %v3560 = vunpack.c.l.b16 %v3496
    %v3561 = vunpack.c.l.b16 %v3497
    %v3562 = vunpack.c.l.b16 %v3498
    %v3563 = vunpack.c.l.b16 %v3499
    %v3564 = vunpack.c.l.b16 %v3500
    %v3565 = vunpack.c.l.b16 %v3501
    %v3566 = vunpack.c.l.b16 %v3502
    %v3567 = vunpack.c.l.b16 %v3503
    %v3568 = vunpack.c.l.b16 %v3504
    %v3569 = vunpack.c.l.b16 %v3505
    %v3570 = vunpack.c.l.b16 %v3506
    %v3571 = vunpack.c.l.b16 %v3507
    %v3572 = vunpack.c.l.b16 %v3508
    %v3573 = vunpack.c.l.b16 %v3509
    %v3574 = vunpack.c.l.b16 %v3510
    %v3575 = vunpack.c.l.b16 %v3511
    %v3576 = vunpack.c.l.b16 %v3512
    %v3577 = vunpack.c.l.b16 %v3513
    %v3578 = vunpack.c.l.b16 %v3514
    %v3579 = vunpack.c.l.b16 %v3515
    %v3580 = vunpack.c.l.b16 %v3516
    %v3581 = vunpack.c.l.b16 %v3517
    %v3582 = vunpack.c.l.b16 %v3518
    %v3583 = vunpack.c.l.b16 %v3519
    %v3584 = vunpack.c.l.b16 %v3520
    %v3585 = vunpack.c.l.b16 %v3521
    %v3586 = vunpack.c.l.b16 %v3522
    %v3587 = vunpack.c.l.b16 %v3523
    %v3588 = vunpack.c.l.b16 %v3524
    %v3589 = vunpack.c.l.b16 %v3525
    %v3590 = vpack.c.b16 %v3559, %v3558
    %v3591 = vpack.c.b16 %v3561, %v3560
    %v3592 = vpack.c.b16 %v3563, %v3562
    %v3593 = vpack.c.b16 %v3565, %v3564
    %v3594 = vpack.c.b16 %v3567, %v3566
    %v3595 = vpack.c.b16 %v3569, %v3568
    %v3596 = vpack.c.b16 %v3571, %v3570
    %v3597 = vpack.c.b16 %v3573, %v3572
    %v3598 = vpack.c.b16 %v3575, %v3574
    %v3599 = vpack.c.b16 %v3577, %v3576
    %v3600 = vpack.c.b16 %v3579, %v3578
    %v3601 = vpack.c.b16 %v3581, %v3580
    %v3602 = vpack.c.b16 %v3583, %v3582
    %v3603 = vpack.c.b16 %v3585, %v3584
    %v3604 = vpack.c.b16 %v3587, %v3586
    %v3605 = vpack.c.b16 %v3589, %v3588
    %3622 = vmatprep.subr.bf16.mxu0 0
    %3623 = vmatpush1.bf16.msra.mxu0 %v3590
    %3624 = vmatprep.subr.bf16.mxu0 0
    %3625 = vmatpush1.bf16.msra.mxu0 %v3591
    %3626 = vmatprep.subr.bf16.mxu0 0
    %3627 = vmatpush1.bf16.msra.mxu0 %v3592
    %3628 = vmatprep.subr.bf16.mxu0 0
    %3629 = vmatpush1.bf16.msra.mxu0 %v3593
    %3630 = vmatprep.subr.bf16.mxu0 0
    %3631 = vmatpush1.bf16.msra.mxu0 %v3594
    %3632 = vmatprep.subr.bf16.mxu0 0
    %3633 = vmatpush1.bf16.msra.mxu0 %v3595
    %3634 = vmatprep.subr.bf16.mxu0 0
    %3635 = vmatpush1.bf16.msra.mxu0 %v3596
    %3636 = vmatprep.subr.bf16.mxu0 0
    %3637 = vmatpush1.bf16.msra.mxu0 %v3597
    %3638 = vmatprep.subr.bf16.mxu0 0
    %3639 = vmatpush1.bf16.msra.mxu0 %v3598
    %3640 = vmatprep.subr.bf16.mxu0 0
    %3641 = vmatpush1.bf16.msra.mxu0 %v3599
    %3642 = vmatprep.subr.bf16.mxu0 0
    %3643 = vmatpush1.bf16.msra.mxu0 %v3600
    %3644 = vmatprep.subr.bf16.mxu0 0
    %3645 = vmatpush1.bf16.msra.mxu0 %v3601
    %3646 = vmatprep.subr.bf16.mxu0 0
    %3647 = vmatpush1.bf16.msra.mxu0 %v3602
    %3648 = vmatprep.subr.bf16.mxu0 0
    %3649 = vmatpush1.bf16.msra.mxu0 %v3603
    %3650 = vmatprep.subr.bf16.mxu0 0
    %3651 = vmatpush1.bf16.msra.mxu0 %v3604
    %3652 = vmatprep.subr.bf16.mxu0 0
    %3653 = vmatpush1.bf16.msra.mxu0 %v3605
    %3654 = vmatprep.mubr.bf16.mxu0 %v3325
    %3655 = vmatmul.mubr.bf16.gmra.mrb[0].mxu0 %v3324
    %v3656 = vpop.f32.mrb[0].mxu0
    %v3657 = vadd.f32 0.0, %v3656
    %v3658 = vpop.f32.mrb[0].mxu0
    %v3659 = vpop.f32.mrb[0].mxu0
    %v3660 = vpop.f32.mrb[0].mxu0
    %3661 = vdwg.mxu0
    %v3662 = vadd.f32 %v3489, %v3657
    %v3663 = vmul.f32 %v3489, %v3657
    %v3664 = vsub.f32 %v3662, %v3663
    %v3665 = vsub.f32 1.0, %v3664
    %3666 = vst [vmem:[#allocation20] sm:$0xff] %v3665
    // Predicated region
    $region90: #{tpu_custom_call.1} parent=1 // pred_check
      _
    $region91: #{tpu_custom_call.1} parent=1 // pred_check_branch
      %3668 = sbr.rel (0) target = $region93
    $region92: #{tpu_custom_call.1} parent=1 // pred_region
      %s3670 = ssub.s32 128, 128
      %3671 = vsyncadd [#allocation4], %s3670
      %s3673 = sshll.u32 [#allocation20], 4
      %s3674 = int_to_ptr.vmem [resolvable:$true] %s3673
      %3676 = dma.vmem_to_hbm [thread:$0]  %s3674, 128, %s11, [#allocation4]
    $region93: #{tpu_custom_call.1} parent=1 // pred_fallthru
      _
    // Predicated region
    $region94: #{tpu_custom_call.1} parent=1 // pred_check
      _
    $region95: #{tpu_custom_call.1} parent=1 // pred_check_branch
      %3678 = sbr.rel (0) target = $region97
    $region96: #{tpu_custom_call.1} parent=1 // pred_region
      %3679 = dma.done [#allocation4], 128
    $region97: #{tpu_custom_call.1} parent=1 // pred_fallthru
      _
    %3680 = vsyncpa [#allocation3], 1
    %3681 = vsyncpa [#allocation6], 1
    %3682 = vsyncpa [#allocation9], 1
    %3683 = vsyncpa [#allocation12], 1
    %3684 = vsyncpa [#allocation15], 1
    %3685 = vsyncpa [#allocation18], 1
    %3686 = vsyncpa [#allocation4], 1

</llo_original>
